<compile_context>
chip_gen: v7x
topology: tpu7x:2x2x1
jax: 0.10.0
libtpu: 0.0.40
codegen_flags: <defaults>
</compile_context>

<pallas_src>
import functools

import jax
import jax.numpy as jnp
from jax.experimental import pallas as pl
from jax.experimental.pallas import tpu as pltpu

NEG_LARGE = -1e30  # finite "-inf" for masked class lanes


def _round_up(n, m):
    return (n + m - 1) // m * m


def mlp_kernel(x_ref, w1_ref, b1_ref, w2_ref, b2_ref,
               w3_ref, b3_ref, w4_ref, b4_ref, out_ref, *, num_classes):
    """Full classifier forward for one (TM, D_IN) batch tile.

    x_ref and all weights are bf16; biases f32; all accumulation/elementwise in f32.
    """
    x = x_ref[...]  # bf16 (TM, D_IN)

    # fc1 -> relu   (dropout = identity in eval mode)
    h = jnp.dot(x, w1_ref[...], preferred_element_type=jnp.float32) + b1_ref[...]
    h = jnp.maximum(h, 0.0)

    # fc2 -> relu
    h = jnp.dot(h.astype(jnp.bfloat16), w2_ref[...],
                preferred_element_type=jnp.float32) + b2_ref[...]
    h = jnp.maximum(h, 0.0)

    # fc3 -> relu
    h = jnp.dot(h.astype(jnp.bfloat16), w3_ref[...],
                preferred_element_type=jnp.float32) + b3_ref[...]
    h = jnp.maximum(h, 0.0)

    # fc4 -> log_softmax over the (padded, lane-dense) class axis
    logits = jnp.dot(h.astype(jnp.bfloat16), w4_ref[...],
                     preferred_element_type=jnp.float32) + b4_ref[...]
    lane = jax.lax.broadcasted_iota(jnp.int32, logits.shape, 1)
    logits = jnp.where(lane < num_classes, logits, NEG_LARGE)

    m = jnp.max(logits, axis=-1, keepdims=True)
    shifted = logits - m
    lse = jnp.log(jnp.sum(jnp.exp(shifted), axis=-1, keepdims=True))
    out_ref[...] = shifted - lse


def classifier_forward(x_nchw, prepared_params, *, num_classes=10, tm=128):
    """x_nchw: (B, C, H, W) float32. Returns (B, num_classes) log-probabilities.

    prepared_params: bf16 weights (in, out) with fc4 padded to 128 out lanes,
    f32 biases (1, out).
    """
    b = x_nchw.shape[0]
    x2d = x_nchw.reshape(b, -1).astype(jnp.bfloat16)  # same as torch x.view(B, -1)
    d_in = x2d.shape[1]
    w1, b1, w2, b2, w3, b3, w4, b4 = prepared_params
    out_pad = w4.shape[1]  # 128 (lane-dense)

    # Batch tile: multiple of 8 sublanes, at most `tm` rows; pad batch to fit.
    tile_m = min(tm, _round_up(b, 8))
    b_pad = _round_up(b, tile_m)
    if b_pad != b:
        x2d = jnp.pad(x2d, ((0, b_pad - b), (0, 0)))
    grid = (b_pad // tile_m,)

    def resident(arr):
        # Whole-array block, same block every grid step -> stays in VMEM.
        return pl.BlockSpec(arr.shape, lambda i, _nd=arr.ndim: (0,) * _nd)

    flops = 2 * b_pad * (d_in * w1.shape[1] + w1.shape[1] * w2.shape[1]
                         + w2.shape[1] * w3.shape[1] + w3.shape[1] * out_pad)
    bytes_accessed = (x2d.nbytes
                      + sum(int(p.nbytes) for p in prepared_params)
                      + b_pad * out_pad * 4)
    cost = pl.CostEstimate(flops=flops,
                           transcendentals=b_pad * out_pad,
                           bytes_accessed=bytes_accessed)

    out = pl.pallas_call(
        functools.partial(mlp_kernel, num_classes=num_classes),
        out_shape=jax.ShapeDtypeStruct((b_pad, out_pad), jnp.float32),
        grid=grid,
        in_specs=[pl.BlockSpec((tile_m, d_in), lambda i: (i, 0)),
                  resident(w1), resident(b1),
                  resident(w2), resident(b2),
                  resident(w3), resident(b3),
                  resident(w4), resident(b4)],
        out_specs=pl.BlockSpec((tile_m, out_pad), lambda i: (i, 0)),
        compiler_params=pltpu.CompilerParams(
            dimension_semantics=("parallel",)),
        cost_estimate=cost,
    )(x2d, w1, b1, w2, b2, w3, b3, w4, b4)

    return out[:b, :num_classes]


def init_linear(key, fan_in, fan_out):
    """PyTorch-style uniform(-1/sqrt(fan_in), 1/sqrt(fan_in)) init.
    Weight stored as (fan_in, fan_out); bias as (1, fan_out)."""
    kw, kb = jax.random.split(key)
    bound = 1.0 / jnp.sqrt(jnp.float32(fan_in))
    w = jax.random.uniform(kw, (fan_in, fan_out), jnp.float32, -bound, bound)
    b = jax.random.uniform(kb, (1, fan_out), jnp.float32, -bound, bound)
    return w, b


def prepare_params(params_f32, num_classes, out_pad=128):
    """Cast weights to bf16, pad fc4 class axis to out_pad lanes (zeros)."""
    w1, b1, w2, b2, w3, b3, w4, b4 = params_f32
    w4p = jnp.pad(w4, ((0, 0), (0, out_pad - num_classes)))
    b4p = jnp.pad(b4, ((0, 0), (0, out_pad - num_classes)))
    bf = lambda w: w.astype(jnp.bfloat16)
    return (bf(w1), b1, bf(w2), b2, bf(w3), b3, bf(w4p), b4p)


def reference_forward(x_nchw, prepared_params, num_classes):
    """Pure-JAX reference using the same bf16-operand / f32-accumulate recipe."""
    b = x_nchw.shape[0]
    x = x_nchw.reshape(b, -1).astype(jnp.bfloat16)
    w1, b1, w2, b2, w3, b3, w4, b4 = prepared_params
    h = jnp.maximum(jnp.dot(x, w1, preferred_element_type=jnp.float32) + b1, 0.0)
    h = jnp.maximum(jnp.dot(h.astype(jnp.bfloat16), w2,
                            preferred_element_type=jnp.float32) + b2, 0.0)
    h = jnp.maximum(jnp.dot(h.astype(jnp.bfloat16), w3,
                            preferred_element_type=jnp.float32) + b3, 0.0)
    logits = jnp.dot(h.astype(jnp.bfloat16), w4,
                     preferred_element_type=jnp.float32) + b4
    logits = logits[:, :num_classes]
    return jax.nn.log_softmax(logits, axis=1)


if __name__ == "__main__":
    # Small shapes consistent with the module (flatten -> 4 Linears -> log_softmax)
    B, C, H, W = 2, 3, 16, 16
    D_IN = C * H * W          # 768  (stands in for 150528)
    H1, H2, H3, OUT = 512, 256, 128, 10

    root = jax.random.PRNGKey(0)
    k_x, k1, k2, k3, k4 = jax.random.split(root, 5)

    x = jax.random.normal(k_x, (B, C, H, W), jnp.float32)

    w1, b1 = init_linear(k1, D_IN, H1)
    w2, b2 = init_linear(k2, H1, H2)
    w3, b3 = init_linear(k3, H2, H3)
    w4, b4 = init_linear(k4, H3, OUT)
    params = prepare_params((w1, b1, w2, b2, w3, b3, w4, b4), num_classes=OUT)

    out = classifier_forward(x, params, num_classes=OUT)
    out = jax.block_until_ready(out)

    ref = reference_forward(x, params, num_classes=OUT)
    assert out.shape == (B, OUT), out.shape
    max_err = jnp.max(jnp.abs(out - ref))
    assert jnp.allclose(out, ref, atol=2e-3, rtol=2e-3), f"max abs err {max_err}"
    # log_softmax rows must normalize: logsumexp(row) == 0
    assert jnp.allclose(jax.scipy.special.logsumexp(out, axis=1),
                        jnp.zeros((B,)), atol=2e-3)

    print("KERNEL_OK")
</pallas_src>

<mosaic_0001>
module attributes {stable_mosaic.version = 11 : i64} {
  func.func @mlp_kernel(%arg0: i32, %arg1: memref<8x768xbf16, #tpu.memory_space<vmem>>, %arg2: memref<768x512xbf16, #tpu.memory_space<vmem>>, %arg3: memref<1x512xf32, #tpu.memory_space<vmem>>, %arg4: memref<512x256xbf16, #tpu.memory_space<vmem>>, %arg5: memref<1x256xf32, #tpu.memory_space<vmem>>, %arg6: memref<256x128xbf16, #tpu.memory_space<vmem>>, %arg7: memref<1x128xf32, #tpu.memory_space<vmem>>, %arg8: memref<128x128xbf16, #tpu.memory_space<vmem>>, %arg9: memref<1x128xf32, #tpu.memory_space<vmem>>, %arg10: memref<8x128xf32, #tpu.memory_space<vmem>>) attributes {dimension_semantics = [#tpu.dimension_semantics<parallel>], iteration_bounds = array<i64: 1>, scalar_prefetch = 0 : i64, scratch_operands = 0 : i64, tpu.core_type = #tpu.core_type<tc>, window_params = [{transform_indices = @transform_0, window_bounds = array<i64: 8, 768>}, {pipeline_mode = #tpu.pipeline_mode<synchronous>, transform_indices = @transform_1, window_bounds = array<i64: 768, 512>}, {pipeline_mode = #tpu.pipeline_mode<synchronous>, transform_indices = @transform_2, window_bounds = array<i64: 1, 512>}, {pipeline_mode = #tpu.pipeline_mode<synchronous>, transform_indices = @transform_3, window_bounds = array<i64: 512, 256>}, {pipeline_mode = #tpu.pipeline_mode<synchronous>, transform_indices = @transform_4, window_bounds = array<i64: 1, 256>}, {pipeline_mode = #tpu.pipeline_mode<synchronous>, transform_indices = @transform_5, window_bounds = array<i64: 256, 128>}, {pipeline_mode = #tpu.pipeline_mode<synchronous>, transform_indices = @transform_6, window_bounds = array<i64: 1, 128>}, {pipeline_mode = #tpu.pipeline_mode<synchronous>, transform_indices = @transform_7, window_bounds = array<i64: 128, 128>}, {pipeline_mode = #tpu.pipeline_mode<synchronous>, transform_indices = @transform_8, window_bounds = array<i64: 1, 128>}, {transform_indices = @transform_9, window_bounds = array<i64: 8, 128>}]} {
    %c0 = arith.constant 0 : index
    %c0_0 = arith.constant 0 : index
    %0 = vector.load %arg1[%c0, %c0_0] : memref<8x768xbf16, #tpu.memory_space<vmem>>, vector<8x768xbf16>
    %c0_1 = arith.constant 0 : index
    %c0_2 = arith.constant 0 : index
    %1 = vector.load %arg2[%c0_1, %c0_2] : memref<768x512xbf16, #tpu.memory_space<vmem>>, vector<768x512xbf16>
    %cst = arith.constant dense<0.000000e+00> : vector<8x512xf32>
    %2 = tpu.matmul %0, %1, %cst {dimension_numbers = #tpu.dot_dimension_numbers<[1], [0], [0], [1], [0, 0, 1, 1], [], []>} : vector<8x768xbf16>, vector<768x512xbf16>, vector<8x512xf32> -> vector<8x512xf32>
    %c0_3 = arith.constant 0 : index
    %c0_4 = arith.constant 0 : index
    %3 = vector.load %arg3[%c0_3, %c0_4] : memref<1x512xf32, #tpu.memory_space<vmem>>, vector<1x512xf32>
    %4 = vector.broadcast %3 : vector<1x512xf32> to vector<8x512xf32>
    %5 = arith.addf %2, %4 : vector<8x512xf32>
    %cst_5 = arith.constant 0.000000e+00 : f32
    %6 = vector.broadcast %cst_5 : f32 to vector<8x512xf32>
    %7 = arith.maximumf %5, %6 : vector<8x512xf32>
    %8 = arith.truncf %7 : vector<8x512xf32> to vector<8x512xbf16>
    %c0_6 = arith.constant 0 : index
    %c0_7 = arith.constant 0 : index
    %9 = vector.load %arg4[%c0_6, %c0_7] : memref<512x256xbf16, #tpu.memory_space<vmem>>, vector<512x256xbf16>
    %cst_8 = arith.constant dense<0.000000e+00> : vector<8x256xf32>
    %10 = tpu.matmul %8, %9, %cst_8 {dimension_numbers = #tpu.dot_dimension_numbers<[1], [0], [0], [1], [0, 0, 1, 1], [], []>} : vector<8x512xbf16>, vector<512x256xbf16>, vector<8x256xf32> -> vector<8x256xf32>
    %c0_9 = arith.constant 0 : index
    %c0_10 = arith.constant 0 : index
    %11 = vector.load %arg5[%c0_9, %c0_10] : memref<1x256xf32, #tpu.memory_space<vmem>>, vector<1x256xf32>
    %12 = vector.broadcast %11 : vector<1x256xf32> to vector<8x256xf32>
    %13 = arith.addf %10, %12 : vector<8x256xf32>
    %cst_11 = arith.constant 0.000000e+00 : f32
    %14 = vector.broadcast %cst_11 : f32 to vector<8x256xf32>
    %15 = arith.maximumf %13, %14 : vector<8x256xf32>
    %16 = arith.truncf %15 : vector<8x256xf32> to vector<8x256xbf16>
    %c0_12 = arith.constant 0 : index
    %c0_13 = arith.constant 0 : index
    %17 = vector.load %arg6[%c0_12, %c0_13] : memref<256x128xbf16, #tpu.memory_space<vmem>>, vector<256x128xbf16>
    %cst_14 = arith.constant dense<0.000000e+00> : vector<8x128xf32>
    %18 = tpu.matmul %16, %17, %cst_14 {dimension_numbers = #tpu.dot_dimension_numbers<[1], [0], [0], [1], [0, 0, 1, 1], [], []>} : vector<8x256xbf16>, vector<256x128xbf16>, vector<8x128xf32> -> vector<8x128xf32>
    %c0_15 = arith.constant 0 : index
    %c0_16 = arith.constant 0 : index
    %19 = vector.load %arg7[%c0_15, %c0_16] : memref<1x128xf32, #tpu.memory_space<vmem>>, vector<1x128xf32>
    %20 = vector.broadcast %19 : vector<1x128xf32> to vector<8x128xf32>
    %21 = arith.addf %18, %20 : vector<8x128xf32>
    %cst_17 = arith.constant 0.000000e+00 : f32
    %22 = vector.broadcast %cst_17 : f32 to vector<8x128xf32>
    %23 = arith.maximumf %21, %22 : vector<8x128xf32>
    %24 = arith.truncf %23 : vector<8x128xf32> to vector<8x128xbf16>
    %c0_18 = arith.constant 0 : index
    %c0_19 = arith.constant 0 : index
    %25 = vector.load %arg8[%c0_18, %c0_19] : memref<128x128xbf16, #tpu.memory_space<vmem>>, vector<128x128xbf16>
    %cst_20 = arith.constant dense<0.000000e+00> : vector<8x128xf32>
    %26 = tpu.matmul %24, %25, %cst_20 {dimension_numbers = #tpu.dot_dimension_numbers<[1], [0], [0], [1], [0, 0, 1, 1], [], []>} : vector<8x128xbf16>, vector<128x128xbf16>, vector<8x128xf32> -> vector<8x128xf32>
    %c0_21 = arith.constant 0 : index
    %c0_22 = arith.constant 0 : index
    %27 = vector.load %arg9[%c0_21, %c0_22] : memref<1x128xf32, #tpu.memory_space<vmem>>, vector<1x128xf32>
    %28 = vector.broadcast %27 : vector<1x128xf32> to vector<8x128xf32>
    %29 = arith.addf %26, %28 : vector<8x128xf32>
    %30 = tpu.iota {dimensions = array<i32: 1>} : vector<8x128xi32>
    %c10_i32 = arith.constant 10 : i32
    %31 = vector.broadcast %c10_i32 : i32 to vector<8x128xi32>
    %32 = arith.cmpi slt, %30, %31 : vector<8x128xi32>
    %cst_23 = arith.constant -1.000000e+30 : f32
    %33 = vector.broadcast %cst_23 : f32 to vector<8x128xf32>
    %34 = arith.select %32, %29, %33 : vector<8x128xi1>, vector<8x128xf32>
    %cst_24 = arith.constant dense<0xFF800000> : vector<8xf32>
    %35 = vector.multi_reduction <maximumf>, %34, %cst_24 [1] : vector<8x128xf32> to vector<8xf32>
    %36 = vector.shape_cast %35 : vector<8xf32> to vector<8x1xf32>
    %37 = vector.broadcast %36 : vector<8x1xf32> to vector<8x128xf32>
    %38 = arith.subf %34, %37 : vector<8x128xf32>
    %39 = math.exp %38 : vector<8x128xf32>
    %cst_25 = arith.constant dense<0.000000e+00> : vector<8xf32>
    %40 = vector.multi_reduction <add>, %39, %cst_25 [1] : vector<8x128xf32> to vector<8xf32>
    %41 = vector.shape_cast %40 : vector<8xf32> to vector<8x1xf32>
    %42 = math.log %41 : vector<8x1xf32>
    %43 = vector.broadcast %42 : vector<8x1xf32> to vector<8x128xf32>
    %44 = arith.subf %38, %43 : vector<8x128xf32>
    %c0_26 = arith.constant 0 : index
    %c0_27 = arith.constant 0 : index
    %45 = vector.load %arg10[%c0_26, %c0_27] : memref<8x128xf32, #tpu.memory_space<vmem>>, vector<8x128xf32>
    tpu.vector_store %arg10[%c0_26, %c0_27], %44 {strides = array<i32>} : memref<8x128xf32, #tpu.memory_space<vmem>>, vector<8x128xf32>,
    return
  }
  func.func @transform_0(%arg0: i32) -> (i32, i32) {
    %c0_i32 = arith.constant 0 : i32
    %c0_i32_0 = arith.constant 0 : i32
    return %arg0, %c0_i32 : i32, i32
  }
  func.func @transform_1(%arg0: i32) -> (i32, i32) {
    %c0_i32 = arith.constant 0 : i32
    %c0_i32_0 = arith.constant 0 : i32
    %c0_i32_1 = arith.constant 0 : i32
    return %c0_i32, %c0_i32_0 : i32, i32
  }
  func.func @transform_2(%arg0: i32) -> (i32, i32) {
    %c0_i32 = arith.constant 0 : i32
    %c0_i32_0 = arith.constant 0 : i32
    %c0_i32_1 = arith.constant 0 : i32
    return %c0_i32, %c0_i32_0 : i32, i32
  }
  func.func @transform_3(%arg0: i32) -> (i32, i32) {
    %c0_i32 = arith.constant 0 : i32
    %c0_i32_0 = arith.constant 0 : i32
    %c0_i32_1 = arith.constant 0 : i32
    return %c0_i32, %c0_i32_0 : i32, i32
  }
  func.func @transform_4(%arg0: i32) -> (i32, i32) {
    %c0_i32 = arith.constant 0 : i32
    %c0_i32_0 = arith.constant 0 : i32
    %c0_i32_1 = arith.constant 0 : i32
    return %c0_i32, %c0_i32_0 : i32, i32
  }
  func.func @transform_5(%arg0: i32) -> (i32, i32) {
    %c0_i32 = arith.constant 0 : i32
    %c0_i32_0 = arith.constant 0 : i32
    %c0_i32_1 = arith.constant 0 : i32
    return %c0_i32, %c0_i32_0 : i32, i32
  }
  func.func @transform_6(%arg0: i32) -> (i32, i32) {
    %c0_i32 = arith.constant 0 : i32
    %c0_i32_0 = arith.constant 0 : i32
    %c0_i32_1 = arith.constant 0 : i32
    return %c0_i32, %c0_i32_0 : i32, i32
  }
  func.func @transform_7(%arg0: i32) -> (i32, i32) {
    %c0_i32 = arith.constant 0 : i32
    %c0_i32_0 = arith.constant 0 : i32
    %c0_i32_1 = arith.constant 0 : i32
    return %c0_i32, %c0_i32_0 : i32, i32
  }
  func.func @transform_8(%arg0: i32) -> (i32, i32) {
    %c0_i32 = arith.constant 0 : i32
    %c0_i32_0 = arith.constant 0 : i32
    %c0_i32_1 = arith.constant 0 : i32
    return %c0_i32, %c0_i32_0 : i32, i32
  }
  func.func @transform_9(%arg0: i32) -> (i32, i32) {
    %c0_i32 = arith.constant 0 : i32
    %c0_i32_0 = arith.constant 0 : i32
    return %arg0, %c0_i32 : i32, i32
  }
}

</mosaic_0001>

<llo_original>
// kernel: tpu_custom_call.1
$region0: #{tpu_custom_call.1}
  #allocation0 [shape = 'u32[]', space=smem, size = 0x4, offset = 0x4, fixed_abs, tag = 'smem constant byte address 0x4 - core index']
  #allocation1 [shape = 'u32[144,128]{1,0:T(1,128)}', space=vmem, size = 0x12000, scoped, tag = 'internal scratch']
  %s0 = inlined_call_operand.hbm [shape: bf16[8,768], index: 0, kind: input, shape index: {}]
  %s1 = inlined_call_operand.hbm [shape: bf16[768,512], index: 1, kind: input, shape index: {}]
  %s2 = inlined_call_operand.vmem [shape: f32[1,512], index: 2, kind: input, shape index: {}]
  %s3 = inlined_call_operand.hbm [shape: bf16[512,256], index: 3, kind: input, shape index: {}]
  %s4 = inlined_call_operand.vmem [shape: f32[1,256], index: 4, kind: input, shape index: {}]
  %s5 = inlined_call_operand.hbm [shape: bf16[256,128], index: 5, kind: input, shape index: {}]
  %s6 = inlined_call_operand.vmem [shape: f32[1,128], index: 6, kind: input, shape index: {}]
  %s7 = inlined_call_operand.hbm [shape: bf16[128,128], index: 7, kind: input, shape index: {}]
  %s8 = inlined_call_operand.vmem [shape: f32[1,128], index: 8, kind: input, shape index: {}]
  %s9 = inlined_call_operand.hbm [shape: f32[8,128], index: 9, kind: output, shape index: {}]
  %s10 = sld [smem:[#allocation0]]
  $region66: #{tpu_custom_call.1} parent=0
    _
  %s12 = ssub.s32 1, %s10
  %s13 = scalar_select 0, %s12, %s10
  $region1: #{tpu_custom_call.1} parent=0
    #allocation2 [shape = 'u8[12288]{0}', space=vmem, size = 0x3000, scoped, tag = 'input window, operand 0, single buffered']
    #allocation3 [shape = 's32[1]{0}', space=sflag, size = 0x4, scoped, tag = 'scoped memory for tpu_custom_call.1']
    #allocation4 [shape = 's32[1]{0}', space=sflag, size = 0x4, scoped, tag = 'scoped memory for tpu_custom_call.1']
    #allocation5 [shape = 'u8[786432]{0}', space=vmem, size = 0xc0000, scoped, tag = 'input window, operand 1, single buffered']
    #allocation6 [shape = 's32[1]{0}', space=sflag, size = 0x4, scoped, tag = 'scoped memory for tpu_custom_call.1']
    #allocation7 [shape = 'u8[262144]{0}', space=vmem, size = 0x40000, scoped, tag = 'input window, operand 3, single buffered']
    #allocation8 [shape = 'u8[65536]{0}', space=vmem, size = 0x10000, scoped, tag = 'input window, operand 5, single buffered']
    #allocation9 [shape = 's32[1]{0}', space=sflag, size = 0x4, scoped, tag = 'scoped memory for tpu_custom_call.1']
    #allocation10 [shape = 'u8[32768]{0}', space=vmem, size = 0x8000, scoped, tag = 'input window, operand 7, single buffered']
    #allocation11 [shape = 'u8[4096]{0}', space=vmem, size = 0x1000, scoped, tag = 'output window, operand 0, single buffered']
    %14 = vsyncpa [#allocation3], 0
    %15 = vsyncpa [#allocation6], 0
    %16 = vsyncpa [#allocation9], 0
    %17 = vsyncpa [#allocation4], 0
    // Predicated region
    $region2: #{tpu_custom_call.1} parent=1 // pred_check
      _
    $region3: #{tpu_custom_call.1} parent=1 // pred_check_branch
      %19 = sbr.rel (0) target = $region5
    $region4: #{tpu_custom_call.1} parent=1 // pred_region
      %s21 = ssub.s32 384, 384
      %22 = vsyncadd [#allocation3], %s21
      %s24 = sshll.u32 [#allocation2], 4
      %s25 = int_to_ptr.vmem [resolvable:$true] %s24
      %27 = dma.hbm_to_vmem [thread:$0]  %s0, 384, %s25, [#allocation3]
    $region5: #{tpu_custom_call.1} parent=1 // pred_fallthru
      _
    // Predicated region
    $region6: #{tpu_custom_call.1} parent=1 // pred_check
      _
    $region7: #{tpu_custom_call.1} parent=1 // pred_check_branch
      %29 = sbr.rel (0) target = $region9
    $region8: #{tpu_custom_call.1} parent=1 // pred_region
      %s31 = ssub.s32 24576, 24576
      %32 = vsyncadd [#allocation6], %s31
      %s33 = sshll.u32 [#allocation5], 4
      %s34 = int_to_ptr.vmem [resolvable:$true] %s33
      %39 = dma.hbm_to_vmem [thread:$0]  %s1, 24576, %s34, [#allocation6], 256, 256, 16
    $region9: #{tpu_custom_call.1} parent=1 // pred_fallthru
      _
    // Predicated region
    $region10: #{tpu_custom_call.1} parent=1 // pred_check
      _
    $region11: #{tpu_custom_call.1} parent=1 // pred_check_branch
      %41 = sbr.rel (0) target = $region13
    $region12: #{tpu_custom_call.1} parent=1 // pred_region
      _
    $region13: #{tpu_custom_call.1} parent=1 // pred_fallthru
      _
    // Predicated region
    $region14: #{tpu_custom_call.1} parent=1 // pred_check
      _
    $region15: #{tpu_custom_call.1} parent=1 // pred_check_branch
      %43 = sbr.rel (0) target = $region17
    $region16: #{tpu_custom_call.1} parent=1 // pred_region
      %s45 = ssub.s32 8192, 8192
      %46 = vsyncadd [#allocation6], %s45
      %s47 = sshll.u32 [#allocation7], 4
      %s48 = int_to_ptr.vmem [resolvable:$true] %s47
      %53 = dma.hbm_to_vmem [thread:$0]  %s3, 8192, %s48, [#allocation6], 128, 128, 8
    $region17: #{tpu_custom_call.1} parent=1 // pred_fallthru
      _
    // Predicated region
    $region18: #{tpu_custom_call.1} parent=1 // pred_check
      _
    $region19: #{tpu_custom_call.1} parent=1 // pred_check_branch
      %55 = sbr.rel (0) target = $region21
    $region20: #{tpu_custom_call.1} parent=1 // pred_region
      _
    $region21: #{tpu_custom_call.1} parent=1 // pred_fallthru
      _
    // Predicated region
    $region22: #{tpu_custom_call.1} parent=1 // pred_check
      _
    $region23: #{tpu_custom_call.1} parent=1 // pred_check_branch
      %57 = sbr.rel (0) target = $region25
    $region24: #{tpu_custom_call.1} parent=1 // pred_region
      %s59 = ssub.s32 2048, 2048
      %60 = vsyncadd [#allocation9], %s59
      %s61 = sshll.u32 [#allocation8], 4
      %s62 = int_to_ptr.vmem [resolvable:$true] %s61
      %67 = dma.hbm_to_vmem [thread:$0]  %s5, 2048, %s62, [#allocation9], 64, 64, 4
    $region25: #{tpu_custom_call.1} parent=1 // pred_fallthru
      _
    // Predicated region
    $region26: #{tpu_custom_call.1} parent=1 // pred_check
      _
    $region27: #{tpu_custom_call.1} parent=1 // pred_check_branch
      %69 = sbr.rel (0) target = $region29
    $region28: #{tpu_custom_call.1} parent=1 // pred_region
      _
    $region29: #{tpu_custom_call.1} parent=1 // pred_fallthru
      _
    // Predicated region
    $region30: #{tpu_custom_call.1} parent=1 // pred_check
      _
    $region31: #{tpu_custom_call.1} parent=1 // pred_check_branch
      %71 = sbr.rel (0) target = $region33
    $region32: #{tpu_custom_call.1} parent=1 // pred_region
      %s73 = ssub.s32 1024, 1024
      %74 = vsyncadd [#allocation9], %s73
      %s75 = sshll.u32 [#allocation10], 4
      %s76 = int_to_ptr.vmem [resolvable:$true] %s75
      %81 = dma.hbm_to_vmem [thread:$0]  %s7, 1024, %s76, [#allocation9], 64, 64, 4
    $region33: #{tpu_custom_call.1} parent=1 // pred_fallthru
      _
    // Predicated region
    $region34: #{tpu_custom_call.1} parent=1 // pred_check
      _
    $region35: #{tpu_custom_call.1} parent=1 // pred_check_branch
      %83 = sbr.rel (0) target = $region37
    $region36: #{tpu_custom_call.1} parent=1 // pred_region
      _
    $region37: #{tpu_custom_call.1} parent=1 // pred_fallthru
      _
    // Predicated region
    $region38: #{tpu_custom_call.1} parent=1 // pred_check
      _
    $region39: #{tpu_custom_call.1} parent=1 // pred_check_branch
      %85 = sbr.rel (0) target = $region41
    $region40: #{tpu_custom_call.1} parent=1 // pred_region
      %86 = dma.done [#allocation3], 384
    $region41: #{tpu_custom_call.1} parent=1 // pred_fallthru
      _
    // Predicated region
    $region42: #{tpu_custom_call.1} parent=1 // pred_check
      _
    $region43: #{tpu_custom_call.1} parent=1 // pred_check_branch
      %88 = sbr.rel (0) target = $region45
    $region44: #{tpu_custom_call.1} parent=1 // pred_region
      %89 = dma.done [#allocation6], 24576
    $region45: #{tpu_custom_call.1} parent=1 // pred_fallthru
      _
    // Predicated region
    $region46: #{tpu_custom_call.1} parent=1 // pred_check
      _
    $region47: #{tpu_custom_call.1} parent=1 // pred_check_branch
      %91 = sbr.rel (0) target = $region49
    $region48: #{tpu_custom_call.1} parent=1 // pred_region
      %92 = dma.done [#allocation6], 8192
    $region49: #{tpu_custom_call.1} parent=1 // pred_fallthru
      _
    // Predicated region
    $region50: #{tpu_custom_call.1} parent=1 // pred_check
      _
    $region51: #{tpu_custom_call.1} parent=1 // pred_check_branch
      %94 = sbr.rel (0) target = $region53
    $region52: #{tpu_custom_call.1} parent=1 // pred_region
      %95 = dma.done [#allocation9], 2048
    $region53: #{tpu_custom_call.1} parent=1 // pred_fallthru
      _
    // Predicated region
    $region54: #{tpu_custom_call.1} parent=1 // pred_check
      _
    $region55: #{tpu_custom_call.1} parent=1 // pred_check_branch
      %97 = sbr.rel (0) target = $region57
    $region56: #{tpu_custom_call.1} parent=1 // pred_region
      %98 = dma.done [#allocation9], 1024
    $region57: #{tpu_custom_call.1} parent=1 // pred_fallthru
      _
    %v100 = vld [vmem:[#allocation2] sm:$0xff]
    %v101 = vld [vmem:[#allocation2 + $0x8] sm:$0xff]
    %v102 = vld [vmem:[#allocation2 + $0x10] sm:$0xff]
    %v103 = vld [vmem:[#allocation5] sm:$0xff]
    %v104 = vld [vmem:[#allocation5 + $0x8] sm:$0xff]
    %v105 = vld [vmem:[#allocation5 + $0x10] sm:$0xff]
    %v106 = vld [vmem:[#allocation5 + $0x18] sm:$0xff]
    %v107 = vld [vmem:[#allocation5 + $0x20] sm:$0xff]
    %v108 = vld [vmem:[#allocation5 + $0x28] sm:$0xff]
    %v109 = vld [vmem:[#allocation5 + $0x30] sm:$0xff]
    %v110 = vld [vmem:[#allocation5 + $0x38] sm:$0xff]
    %v111 = vld [vmem:[#allocation5 + $0x40] sm:$0xff]
    %v112 = vld [vmem:[#allocation5 + $0x48] sm:$0xff]
    %v113 = vld [vmem:[#allocation5 + $0x50] sm:$0xff]
    %v114 = vld [vmem:[#allocation5 + $0x58] sm:$0xff]
    %v115 = vld [vmem:[#allocation5 + $0x60] sm:$0xff]
    %v116 = vld [vmem:[#allocation5 + $0x68] sm:$0xff]
    %v117 = vld [vmem:[#allocation5 + $0x70] sm:$0xff]
    %v118 = vld [vmem:[#allocation5 + $0x78] sm:$0xff]
    %v119 = vld [vmem:[#allocation5 + $0x80] sm:$0xff]
    %v120 = vld [vmem:[#allocation5 + $0x88] sm:$0xff]
    %v121 = vld [vmem:[#allocation5 + $0x90] sm:$0xff]
    %v122 = vld [vmem:[#allocation5 + $0x98] sm:$0xff]
    %v123 = vld [vmem:[#allocation5 + $0xa0] sm:$0xff]
    %v124 = vld [vmem:[#allocation5 + $0xa8] sm:$0xff]
    %v125 = vld [vmem:[#allocation5 + $0xb0] sm:$0xff]
    %v126 = vld [vmem:[#allocation5 + $0xb8] sm:$0xff]
    %v127 = vld [vmem:[#allocation5 + $0xc0] sm:$0xff]
    %v128 = vld [vmem:[#allocation5 + $0xc8] sm:$0xff]
    %v129 = vld [vmem:[#allocation5 + $0xd0] sm:$0xff]
    %v130 = vld [vmem:[#allocation5 + $0xd8] sm:$0xff]
    %v131 = vld [vmem:[#allocation5 + $0xe0] sm:$0xff]
    %v132 = vld [vmem:[#allocation5 + $0xe8] sm:$0xff]
    %v133 = vld [vmem:[#allocation5 + $0xf0] sm:$0xff]
    %v134 = vld [vmem:[#allocation5 + $0xf8] sm:$0xff]
    %v135 = vld [vmem:[#allocation5 + $0x100] sm:$0xff]
    %v136 = vld [vmem:[#allocation5 + $0x108] sm:$0xff]
    %v137 = vld [vmem:[#allocation5 + $0x110] sm:$0xff]
    %v138 = vld [vmem:[#allocation5 + $0x118] sm:$0xff]
    %v139 = vld [vmem:[#allocation5 + $0x120] sm:$0xff]
    %v140 = vld [vmem:[#allocation5 + $0x128] sm:$0xff]
    %v141 = vld [vmem:[#allocation5 + $0x130] sm:$0xff]
    %v142 = vld [vmem:[#allocation5 + $0x138] sm:$0xff]
    %v143 = vld [vmem:[#allocation5 + $0x140] sm:$0xff]
    %v144 = vld [vmem:[#allocation5 + $0x148] sm:$0xff]
    %v145 = vld [vmem:[#allocation5 + $0x150] sm:$0xff]
    %v146 = vld [vmem:[#allocation5 + $0x158] sm:$0xff]
    %v147 = vld [vmem:[#allocation5 + $0x160] sm:$0xff]
    %v148 = vld [vmem:[#allocation5 + $0x168] sm:$0xff]
    %v149 = vld [vmem:[#allocation5 + $0x170] sm:$0xff]
    %v150 = vld [vmem:[#allocation5 + $0x178] sm:$0xff]
    %v151 = vld [vmem:[#allocation5 + $0x180] sm:$0xff]
    %v152 = vld [vmem:[#allocation5 + $0x188] sm:$0xff]
    %v153 = vld [vmem:[#allocation5 + $0x190] sm:$0xff]
    %v154 = vld [vmem:[#allocation5 + $0x198] sm:$0xff]
    %v155 = vld [vmem:[#allocation5 + $0x1a0] sm:$0xff]
    %v156 = vld [vmem:[#allocation5 + $0x1a8] sm:$0xff]
    %v157 = vld [vmem:[#allocation5 + $0x1b0] sm:$0xff]
    %v158 = vld [vmem:[#allocation5 + $0x1b8] sm:$0xff]
    %v159 = vld [vmem:[#allocation5 + $0x1c0] sm:$0xff]
    %v160 = vld [vmem:[#allocation5 + $0x1c8] sm:$0xff]
    %v161 = vld [vmem:[#allocation5 + $0x1d0] sm:$0xff]
    %v162 = vld [vmem:[#allocation5 + $0x1d8] sm:$0xff]
    %v163 = vld [vmem:[#allocation5 + $0x1e0] sm:$0xff]
    %v164 = vld [vmem:[#allocation5 + $0x1e8] sm:$0xff]
    %v165 = vld [vmem:[#allocation5 + $0x1f0] sm:$0xff]
    %v166 = vld [vmem:[#allocation5 + $0x1f8] sm:$0xff]
    %v167 = vld [vmem:[#allocation5 + $0x200] sm:$0xff]
    %v168 = vld [vmem:[#allocation5 + $0x208] sm:$0xff]
    %v169 = vld [vmem:[#allocation5 + $0x210] sm:$0xff]
    %v170 = vld [vmem:[#allocation5 + $0x218] sm:$0xff]
    %v171 = vld [vmem:[#allocation5 + $0x220] sm:$0xff]
    %v172 = vld [vmem:[#allocation5 + $0x228] sm:$0xff]
    %v173 = vld [vmem:[#allocation5 + $0x230] sm:$0xff]
    %v174 = vld [vmem:[#allocation5 + $0x238] sm:$0xff]
    %v175 = vld [vmem:[#allocation5 + $0x240] sm:$0xff]
    %v176 = vld [vmem:[#allocation5 + $0x248] sm:$0xff]
    %v177 = vld [vmem:[#allocation5 + $0x250] sm:$0xff]
    %v178 = vld [vmem:[#allocation5 + $0x258] sm:$0xff]
    %v179 = vld [vmem:[#allocation5 + $0x260] sm:$0xff]
    %v180 = vld [vmem:[#allocation5 + $0x268] sm:$0xff]
    %v181 = vld [vmem:[#allocation5 + $0x270] sm:$0xff]
    %v182 = vld [vmem:[#allocation5 + $0x278] sm:$0xff]
    %v183 = vld [vmem:[#allocation5 + $0x280] sm:$0xff]
    %v184 = vld [vmem:[#allocation5 + $0x288] sm:$0xff]
    %v185 = vld [vmem:[#allocation5 + $0x290] sm:$0xff]
    %v186 = vld [vmem:[#allocation5 + $0x298] sm:$0xff]
    %v187 = vld [vmem:[#allocation5 + $0x2a0] sm:$0xff]
    %v188 = vld [vmem:[#allocation5 + $0x2a8] sm:$0xff]
    %v189 = vld [vmem:[#allocation5 + $0x2b0] sm:$0xff]
    %v190 = vld [vmem:[#allocation5 + $0x2b8] sm:$0xff]
    %v191 = vld [vmem:[#allocation5 + $0x2c0] sm:$0xff]
    %v192 = vld [vmem:[#allocation5 + $0x2c8] sm:$0xff]
    %v193 = vld [vmem:[#allocation5 + $0x2d0] sm:$0xff]
    %v194 = vld [vmem:[#allocation5 + $0x2d8] sm:$0xff]
    %v195 = vld [vmem:[#allocation5 + $0x2e0] sm:$0xff]
    %v196 = vld [vmem:[#allocation5 + $0x2e8] sm:$0xff]
    %v197 = vld [vmem:[#allocation5 + $0x2f0] sm:$0xff]
    %v198 = vld [vmem:[#allocation5 + $0x2f8] sm:$0xff]
    %v199 = vld [vmem:[#allocation5 + $0x300] sm:$0xff]
    %v200 = vld [vmem:[#allocation5 + $0x308] sm:$0xff]
    %v201 = vld [vmem:[#allocation5 + $0x310] sm:$0xff]
    %v202 = vld [vmem:[#allocation5 + $0x318] sm:$0xff]
    %v203 = vld [vmem:[#allocation5 + $0x320] sm:$0xff]
    %v204 = vld [vmem:[#allocation5 + $0x328] sm:$0xff]
    %v205 = vld [vmem:[#allocation5 + $0x330] sm:$0xff]
    %v206 = vld [vmem:[#allocation5 + $0x338] sm:$0xff]
    %v207 = vld [vmem:[#allocation5 + $0x340] sm:$0xff]
    %v208 = vld [vmem:[#allocation5 + $0x348] sm:$0xff]
    %v209 = vld [vmem:[#allocation5 + $0x350] sm:$0xff]
    %v210 = vld [vmem:[#allocation5 + $0x358] sm:$0xff]
    %v211 = vld [vmem:[#allocation5 + $0x360] sm:$0xff]
    %v212 = vld [vmem:[#allocation5 + $0x368] sm:$0xff]
    %v213 = vld [vmem:[#allocation5 + $0x370] sm:$0xff]
    %v214 = vld [vmem:[#allocation5 + $0x378] sm:$0xff]
    %v215 = vld [vmem:[#allocation5 + $0x380] sm:$0xff]
    %v216 = vld [vmem:[#allocation5 + $0x388] sm:$0xff]
    %v217 = vld [vmem:[#allocation5 + $0x390] sm:$0xff]
    %v218 = vld [vmem:[#allocation5 + $0x398] sm:$0xff]
    %v219 = vld [vmem:[#allocation5 + $0x3a0] sm:$0xff]
    %v220 = vld [vmem:[#allocation5 + $0x3a8] sm:$0xff]
    %v221 = vld [vmem:[#allocation5 + $0x3b0] sm:$0xff]
    %v222 = vld [vmem:[#allocation5 + $0x3b8] sm:$0xff]
    %v223 = vld [vmem:[#allocation5 + $0x3c0] sm:$0xff]
    %v224 = vld [vmem:[#allocation5 + $0x3c8] sm:$0xff]
    %v225 = vld [vmem:[#allocation5 + $0x3d0] sm:$0xff]
    %v226 = vld [vmem:[#allocation5 + $0x3d8] sm:$0xff]
    %v227 = vld [vmem:[#allocation5 + $0x3e0] sm:$0xff]
    %v228 = vld [vmem:[#allocation5 + $0x3e8] sm:$0xff]
    %v229 = vld [vmem:[#allocation5 + $0x3f0] sm:$0xff]
    %v230 = vld [vmem:[#allocation5 + $0x3f8] sm:$0xff]
    %v231 = vld [vmem:[#allocation5 + $0x400] sm:$0xff]
    %v232 = vld [vmem:[#allocation5 + $0x408] sm:$0xff]
    %v233 = vld [vmem:[#allocation5 + $0x410] sm:$0xff]
    %v234 = vld [vmem:[#allocation5 + $0x418] sm:$0xff]
    %v235 = vld [vmem:[#allocation5 + $0x420] sm:$0xff]
    %v236 = vld [vmem:[#allocation5 + $0x428] sm:$0xff]
    %v237 = vld [vmem:[#allocation5 + $0x430] sm:$0xff]
    %v238 = vld [vmem:[#allocation5 + $0x438] sm:$0xff]
    %v239 = vld [vmem:[#allocation5 + $0x440] sm:$0xff]
    %v240 = vld [vmem:[#allocation5 + $0x448] sm:$0xff]
    %v241 = vld [vmem:[#allocation5 + $0x450] sm:$0xff]
    %v242 = vld [vmem:[#allocation5 + $0x458] sm:$0xff]
    %v243 = vld [vmem:[#allocation5 + $0x460] sm:$0xff]
    %v244 = vld [vmem:[#allocation5 + $0x468] sm:$0xff]
    %v245 = vld [vmem:[#allocation5 + $0x470] sm:$0xff]
    %v246 = vld [vmem:[#allocation5 + $0x478] sm:$0xff]
    %v247 = vld [vmem:[#allocation5 + $0x480] sm:$0xff]
    %v248 = vld [vmem:[#allocation5 + $0x488] sm:$0xff]
    %v249 = vld [vmem:[#allocation5 + $0x490] sm:$0xff]
    %v250 = vld [vmem:[#allocation5 + $0x498] sm:$0xff]
    %v251 = vld [vmem:[#allocation5 + $0x4a0] sm:$0xff]
    %v252 = vld [vmem:[#allocation5 + $0x4a8] sm:$0xff]
    %v253 = vld [vmem:[#allocation5 + $0x4b0] sm:$0xff]
    %v254 = vld [vmem:[#allocation5 + $0x4b8] sm:$0xff]
    %v255 = vld [vmem:[#allocation5 + $0x4c0] sm:$0xff]
    %v256 = vld [vmem:[#allocation5 + $0x4c8] sm:$0xff]
    %v257 = vld [vmem:[#allocation5 + $0x4d0] sm:$0xff]
    %v258 = vld [vmem:[#allocation5 + $0x4d8] sm:$0xff]
    %v259 = vld [vmem:[#allocation5 + $0x4e0] sm:$0xff]
    %v260 = vld [vmem:[#allocation5 + $0x4e8] sm:$0xff]
    %v261 = vld [vmem:[#allocation5 + $0x4f0] sm:$0xff]
    %v262 = vld [vmem:[#allocation5 + $0x4f8] sm:$0xff]
    %v263 = vld [vmem:[#allocation5 + $0x500] sm:$0xff]
    %v264 = vld [vmem:[#allocation5 + $0x508] sm:$0xff]
    %v265 = vld [vmem:[#allocation5 + $0x510] sm:$0xff]
    %v266 = vld [vmem:[#allocation5 + $0x518] sm:$0xff]
    %v267 = vld [vmem:[#allocation5 + $0x520] sm:$0xff]
    %v268 = vld [vmem:[#allocation5 + $0x528] sm:$0xff]
    %v269 = vld [vmem:[#allocation5 + $0x530] sm:$0xff]
    %v270 = vld [vmem:[#allocation5 + $0x538] sm:$0xff]
    %v271 = vld [vmem:[#allocation5 + $0x540] sm:$0xff]
    %v272 = vld [vmem:[#allocation5 + $0x548] sm:$0xff]
    %v273 = vld [vmem:[#allocation5 + $0x550] sm:$0xff]
    %v274 = vld [vmem:[#allocation5 + $0x558] sm:$0xff]
    %v275 = vld [vmem:[#allocation5 + $0x560] sm:$0xff]
    %v276 = vld [vmem:[#allocation5 + $0x568] sm:$0xff]
    %v277 = vld [vmem:[#allocation5 + $0x570] sm:$0xff]
    %v278 = vld [vmem:[#allocation5 + $0x578] sm:$0xff]
    %v279 = vld [vmem:[#allocation5 + $0x580] sm:$0xff]
    %v280 = vld [vmem:[#allocation5 + $0x588] sm:$0xff]
    %v281 = vld [vmem:[#allocation5 + $0x590] sm:$0xff]
    %v282 = vld [vmem:[#allocation5 + $0x598] sm:$0xff]
    %v283 = vld [vmem:[#allocation5 + $0x5a0] sm:$0xff]
    %v284 = vld [vmem:[#allocation5 + $0x5a8] sm:$0xff]
    %v285 = vld [vmem:[#allocation5 + $0x5b0] sm:$0xff]
    %v286 = vld [vmem:[#allocation5 + $0x5b8] sm:$0xff]
    %v287 = vld [vmem:[#allocation5 + $0x5c0] sm:$0xff]
    %v288 = vld [vmem:[#allocation5 + $0x5c8] sm:$0xff]
    %v289 = vld [vmem:[#allocation5 + $0x5d0] sm:$0xff]
    %v290 = vld [vmem:[#allocation5 + $0x5d8] sm:$0xff]
    %v291 = vld [vmem:[#allocation5 + $0x5e0] sm:$0xff]
    %v292 = vld [vmem:[#allocation5 + $0x5e8] sm:$0xff]
    %v293 = vld [vmem:[#allocation5 + $0x5f0] sm:$0xff]
    %v294 = vld [vmem:[#allocation5 + $0x5f8] sm:$0xff]
    %v295 = vld [vmem:[%s2] sm:$0xf]
    %v297 = vlaneseq
    %v298 = vshrl.u32 %v297, 7
    %v299 = vsub.s32 0, %v298
    %v300 = vrot.slane %v295, %v299
    %v301 = vlaneseq
    %v302 = vshrl.u32 %v301, 7
    %v303 = vsub.s32 1, %v302
    %v304 = vrot.slane %v295, %v303
    %v305 = vlaneseq
    %v306 = vshrl.u32 %v305, 7
    %v307 = vsub.s32 2, %v306
    %v308 = vrot.slane %v295, %v307
    %v309 = vlaneseq
    %v310 = vshrl.u32 %v309, 7
    %v311 = vsub.s32 3, %v310
    %v312 = vrot.slane %v295, %v311
    %v320 = vunpack.c.l.b16 %v100
    %v321 = vunpack.c.h.b16 %v100
    %v322 = vunpack.c.l.b16 %v101
    %v323 = vunpack.c.h.b16 %v101
    %v324 = vunpack.c.l.b16 %v102
    %v325 = vunpack.c.h.b16 %v102
    %v326 = vpack.c.b16 %v320, %v320
    %v327 = vpack.c.b16 %v321, %v321
    %v328 = vpack.c.b16 %v322, %v322
    %v329 = vpack.c.b16 %v323, %v323
    %v330 = vpack.c.b16 %v324, %v324
    %v331 = vpack.c.b16 %v325, %v325
    %v530 = vunpack.c.l.b16 %v103
    %v531 = vunpack.c.h.b16 %v103
    %v532 = vunpack.c.l.b16 %v104
    %v533 = vunpack.c.h.b16 %v104
    %v534 = vunpack.c.l.b16 %v105
    %v535 = vunpack.c.h.b16 %v105
    %v536 = vunpack.c.l.b16 %v106
    %v537 = vunpack.c.h.b16 %v106
    %v538 = vunpack.c.l.b16 %v107
    %v539 = vunpack.c.h.b16 %v107
    %v540 = vunpack.c.l.b16 %v108
    %v541 = vunpack.c.h.b16 %v108
    %v542 = vunpack.c.l.b16 %v109
    %v543 = vunpack.c.h.b16 %v109
    %v544 = vunpack.c.l.b16 %v110
    %v545 = vunpack.c.h.b16 %v110
    %v546 = vunpack.c.l.b16 %v111
    %v547 = vunpack.c.h.b16 %v111
    %v548 = vunpack.c.l.b16 %v112
    %v549 = vunpack.c.h.b16 %v112
    %v550 = vunpack.c.l.b16 %v113
    %v551 = vunpack.c.h.b16 %v113
    %v552 = vunpack.c.l.b16 %v114
    %v553 = vunpack.c.h.b16 %v114
    %v554 = vunpack.c.l.b16 %v115
    %v555 = vunpack.c.h.b16 %v115
    %v556 = vunpack.c.l.b16 %v116
    %v557 = vunpack.c.h.b16 %v116
    %v558 = vunpack.c.l.b16 %v117
    %v559 = vunpack.c.h.b16 %v117
    %v560 = vunpack.c.l.b16 %v118
    %v561 = vunpack.c.h.b16 %v118
    %v562 = vunpack.c.l.b16 %v119
    %v563 = vunpack.c.h.b16 %v119
    %v564 = vunpack.c.l.b16 %v120
    %v565 = vunpack.c.h.b16 %v120
    %v566 = vunpack.c.l.b16 %v121
    %v567 = vunpack.c.h.b16 %v121
    %v568 = vunpack.c.l.b16 %v122
    %v569 = vunpack.c.h.b16 %v122
    %v570 = vunpack.c.l.b16 %v123
    %v571 = vunpack.c.h.b16 %v123
    %v572 = vunpack.c.l.b16 %v124
    %v573 = vunpack.c.h.b16 %v124
    %v574 = vunpack.c.l.b16 %v125
    %v575 = vunpack.c.h.b16 %v125
    %v576 = vunpack.c.l.b16 %v126
    %v577 = vunpack.c.h.b16 %v126
    %v578 = vunpack.c.l.b16 %v127
    %v579 = vunpack.c.h.b16 %v127
    %v580 = vunpack.c.l.b16 %v128
    %v581 = vunpack.c.h.b16 %v128
    %v582 = vunpack.c.l.b16 %v129
    %v583 = vunpack.c.h.b16 %v129
    %v584 = vunpack.c.l.b16 %v130
    %v585 = vunpack.c.h.b16 %v130
    %v586 = vunpack.c.l.b16 %v131
    %v587 = vunpack.c.h.b16 %v131
    %v588 = vunpack.c.l.b16 %v132
    %v589 = vunpack.c.h.b16 %v132
    %v590 = vunpack.c.l.b16 %v133
    %v591 = vunpack.c.h.b16 %v133
    %v592 = vunpack.c.l.b16 %v134
    %v593 = vunpack.c.h.b16 %v134
    %v594 = vunpack.c.l.b16 %v135
    %v595 = vunpack.c.h.b16 %v135
    %v596 = vunpack.c.l.b16 %v136
    %v597 = vunpack.c.h.b16 %v136
    %v598 = vunpack.c.l.b16 %v137
    %v599 = vunpack.c.h.b16 %v137
    %v600 = vunpack.c.l.b16 %v138
    %v601 = vunpack.c.h.b16 %v138
    %v602 = vunpack.c.l.b16 %v139
    %v603 = vunpack.c.h.b16 %v139
    %v604 = vunpack.c.l.b16 %v140
    %v605 = vunpack.c.h.b16 %v140
    %v606 = vunpack.c.l.b16 %v141
    %v607 = vunpack.c.h.b16 %v141
    %v608 = vunpack.c.l.b16 %v142
    %v609 = vunpack.c.h.b16 %v142
    %v610 = vunpack.c.l.b16 %v143
    %v611 = vunpack.c.h.b16 %v143
    %v612 = vunpack.c.l.b16 %v144
    %v613 = vunpack.c.h.b16 %v144
    %v614 = vunpack.c.l.b16 %v145
    %v615 = vunpack.c.h.b16 %v145
    %v616 = vunpack.c.l.b16 %v146
    %v617 = vunpack.c.h.b16 %v146
    %v618 = vunpack.c.l.b16 %v147
    %v619 = vunpack.c.h.b16 %v147
    %v620 = vunpack.c.l.b16 %v148
    %v621 = vunpack.c.h.b16 %v148
    %v622 = vunpack.c.l.b16 %v149
    %v623 = vunpack.c.h.b16 %v149
    %v624 = vunpack.c.l.b16 %v150
    %v625 = vunpack.c.h.b16 %v150
    %v626 = vunpack.c.l.b16 %v151
    %v627 = vunpack.c.h.b16 %v151
    %v628 = vunpack.c.l.b16 %v152
    %v629 = vunpack.c.h.b16 %v152
    %v630 = vunpack.c.l.b16 %v153
    %v631 = vunpack.c.h.b16 %v153
    %v632 = vunpack.c.l.b16 %v154
    %v633 = vunpack.c.h.b16 %v154
    %v634 = vunpack.c.l.b16 %v155
    %v635 = vunpack.c.h.b16 %v155
    %v636 = vunpack.c.l.b16 %v156
    %v637 = vunpack.c.h.b16 %v156
    %v638 = vunpack.c.l.b16 %v157
    %v639 = vunpack.c.h.b16 %v157
    %v640 = vunpack.c.l.b16 %v158
    %v641 = vunpack.c.h.b16 %v158
    %v642 = vunpack.c.l.b16 %v159
    %v643 = vunpack.c.h.b16 %v159
    %v644 = vunpack.c.l.b16 %v160
    %v645 = vunpack.c.h.b16 %v160
    %v646 = vunpack.c.l.b16 %v161
    %v647 = vunpack.c.h.b16 %v161
    %v648 = vunpack.c.l.b16 %v162
    %v649 = vunpack.c.h.b16 %v162
    %v650 = vunpack.c.l.b16 %v163
    %v651 = vunpack.c.h.b16 %v163
    %v652 = vunpack.c.l.b16 %v164
    %v653 = vunpack.c.h.b16 %v164
    %v654 = vunpack.c.l.b16 %v165
    %v655 = vunpack.c.h.b16 %v165
    %v656 = vunpack.c.l.b16 %v166
    %v657 = vunpack.c.h.b16 %v166
    %v658 = vunpack.c.l.b16 %v167
    %v659 = vunpack.c.h.b16 %v167
    %v660 = vunpack.c.l.b16 %v168
    %v661 = vunpack.c.h.b16 %v168
    %v662 = vunpack.c.l.b16 %v169
    %v663 = vunpack.c.h.b16 %v169
    %v664 = vunpack.c.l.b16 %v170
    %v665 = vunpack.c.h.b16 %v170
    %v666 = vunpack.c.l.b16 %v171
    %v667 = vunpack.c.h.b16 %v171
    %v668 = vunpack.c.l.b16 %v172
    %v669 = vunpack.c.h.b16 %v172
    %v670 = vunpack.c.l.b16 %v173
    %v671 = vunpack.c.h.b16 %v173
    %v672 = vunpack.c.l.b16 %v174
    %v673 = vunpack.c.h.b16 %v174
    %v674 = vunpack.c.l.b16 %v175
    %v675 = vunpack.c.h.b16 %v175
    %v676 = vunpack.c.l.b16 %v176
    %v677 = vunpack.c.h.b16 %v176
    %v678 = vunpack.c.l.b16 %v177
    %v679 = vunpack.c.h.b16 %v177
    %v680 = vunpack.c.l.b16 %v178
    %v681 = vunpack.c.h.b16 %v178
    %v682 = vunpack.c.l.b16 %v179
    %v683 = vunpack.c.h.b16 %v179
    %v684 = vunpack.c.l.b16 %v180
    %v685 = vunpack.c.h.b16 %v180
    %v686 = vunpack.c.l.b16 %v181
    %v687 = vunpack.c.h.b16 %v181
    %v688 = vunpack.c.l.b16 %v182
    %v689 = vunpack.c.h.b16 %v182
    %v690 = vunpack.c.l.b16 %v183
    %v691 = vunpack.c.h.b16 %v183
    %v692 = vunpack.c.l.b16 %v184
    %v693 = vunpack.c.h.b16 %v184
    %v694 = vunpack.c.l.b16 %v185
    %v695 = vunpack.c.h.b16 %v185
    %v696 = vunpack.c.l.b16 %v186
    %v697 = vunpack.c.h.b16 %v186
    %v698 = vunpack.c.l.b16 %v187
    %v699 = vunpack.c.h.b16 %v187
    %v700 = vunpack.c.l.b16 %v188
    %v701 = vunpack.c.h.b16 %v188
    %v702 = vunpack.c.l.b16 %v189
    %v703 = vunpack.c.h.b16 %v189
    %v704 = vunpack.c.l.b16 %v190
    %v705 = vunpack.c.h.b16 %v190
    %v706 = vunpack.c.l.b16 %v191
    %v707 = vunpack.c.h.b16 %v191
    %v708 = vunpack.c.l.b16 %v192
    %v709 = vunpack.c.h.b16 %v192
    %v710 = vunpack.c.l.b16 %v193
    %v711 = vunpack.c.h.b16 %v193
    %v712 = vunpack.c.l.b16 %v194
    %v713 = vunpack.c.h.b16 %v194
    %v714 = vunpack.c.l.b16 %v195
    %v715 = vunpack.c.h.b16 %v195
    %v716 = vunpack.c.l.b16 %v196
    %v717 = vunpack.c.h.b16 %v196
    %v718 = vunpack.c.l.b16 %v197
    %v719 = vunpack.c.h.b16 %v197
    %v720 = vunpack.c.l.b16 %v198
    %v721 = vunpack.c.h.b16 %v198
    %v722 = vunpack.c.l.b16 %v199
    %v723 = vunpack.c.h.b16 %v199
    %v724 = vunpack.c.l.b16 %v200
    %v725 = vunpack.c.h.b16 %v200
    %v726 = vunpack.c.l.b16 %v201
    %v727 = vunpack.c.h.b16 %v201
    %v728 = vunpack.c.l.b16 %v202
    %v729 = vunpack.c.h.b16 %v202
    %v730 = vunpack.c.l.b16 %v203
    %v731 = vunpack.c.h.b16 %v203
    %v732 = vunpack.c.l.b16 %v204
    %v733 = vunpack.c.h.b16 %v204
    %v734 = vunpack.c.l.b16 %v205
    %v735 = vunpack.c.h.b16 %v205
    %v736 = vunpack.c.l.b16 %v206
    %v737 = vunpack.c.h.b16 %v206
    %v738 = vunpack.c.l.b16 %v207
    %v739 = vunpack.c.h.b16 %v207
    %v740 = vunpack.c.l.b16 %v208
    %v741 = vunpack.c.h.b16 %v208
    %v742 = vunpack.c.l.b16 %v209
    %v743 = vunpack.c.h.b16 %v209
    %v744 = vunpack.c.l.b16 %v210
    %v745 = vunpack.c.h.b16 %v210
    %v746 = vunpack.c.l.b16 %v211
    %v747 = vunpack.c.h.b16 %v211
    %v748 = vunpack.c.l.b16 %v212
    %v749 = vunpack.c.h.b16 %v212
    %v750 = vunpack.c.l.b16 %v213
    %v751 = vunpack.c.h.b16 %v213
    %v752 = vunpack.c.l.b16 %v214
    %v753 = vunpack.c.h.b16 %v214
    %v754 = vunpack.c.l.b16 %v215
    %v755 = vunpack.c.h.b16 %v215
    %v756 = vunpack.c.l.b16 %v216
    %v757 = vunpack.c.h.b16 %v216
    %v758 = vunpack.c.l.b16 %v217
    %v759 = vunpack.c.h.b16 %v217
    %v760 = vunpack.c.l.b16 %v218
    %v761 = vunpack.c.h.b16 %v218
    %v762 = vunpack.c.l.b16 %v219
    %v763 = vunpack.c.h.b16 %v219
    %v764 = vunpack.c.l.b16 %v220
    %v765 = vunpack.c.h.b16 %v220
    %v766 = vunpack.c.l.b16 %v221
    %v767 = vunpack.c.h.b16 %v221
    %v768 = vunpack.c.l.b16 %v222
    %v769 = vunpack.c.h.b16 %v222
    %v770 = vunpack.c.l.b16 %v223
    %v771 = vunpack.c.h.b16 %v223
    %v772 = vunpack.c.l.b16 %v224
    %v773 = vunpack.c.h.b16 %v224
    %v774 = vunpack.c.l.b16 %v225
    %v775 = vunpack.c.h.b16 %v225
    %v776 = vunpack.c.l.b16 %v226
    %v777 = vunpack.c.h.b16 %v226
    %v778 = vunpack.c.l.b16 %v227
    %v779 = vunpack.c.h.b16 %v227
    %v780 = vunpack.c.l.b16 %v228
    %v781 = vunpack.c.h.b16 %v228
    %v782 = vunpack.c.l.b16 %v229
    %v783 = vunpack.c.h.b16 %v229
    %v784 = vunpack.c.l.b16 %v230
    %v785 = vunpack.c.h.b16 %v230
    %v786 = vunpack.c.l.b16 %v231
    %v787 = vunpack.c.h.b16 %v231
    %v788 = vunpack.c.l.b16 %v232
    %v789 = vunpack.c.h.b16 %v232
    %v790 = vunpack.c.l.b16 %v233
    %v791 = vunpack.c.h.b16 %v233
    %v792 = vunpack.c.l.b16 %v234
    %v793 = vunpack.c.h.b16 %v234
    %v794 = vunpack.c.l.b16 %v235
    %v795 = vunpack.c.h.b16 %v235
    %v796 = vunpack.c.l.b16 %v236
    %v797 = vunpack.c.h.b16 %v236
    %v798 = vunpack.c.l.b16 %v237
    %v799 = vunpack.c.h.b16 %v237
    %v800 = vunpack.c.l.b16 %v238
    %v801 = vunpack.c.h.b16 %v238
    %v802 = vunpack.c.l.b16 %v239
    %v803 = vunpack.c.h.b16 %v239
    %v804 = vunpack.c.l.b16 %v240
    %v805 = vunpack.c.h.b16 %v240
    %v806 = vunpack.c.l.b16 %v241
    %v807 = vunpack.c.h.b16 %v241
    %v808 = vunpack.c.l.b16 %v242
    %v809 = vunpack.c.h.b16 %v242
    %v810 = vunpack.c.l.b16 %v243
    %v811 = vunpack.c.h.b16 %v243
    %v812 = vunpack.c.l.b16 %v244
    %v813 = vunpack.c.h.b16 %v244
    %v814 = vunpack.c.l.b16 %v245
    %v815 = vunpack.c.h.b16 %v245
    %v816 = vunpack.c.l.b16 %v246
    %v817 = vunpack.c.h.b16 %v246
    %v818 = vunpack.c.l.b16 %v247
    %v819 = vunpack.c.h.b16 %v247
    %v820 = vunpack.c.l.b16 %v248
    %v821 = vunpack.c.h.b16 %v248
    %v822 = vunpack.c.l.b16 %v249
    %v823 = vunpack.c.h.b16 %v249
    %v824 = vunpack.c.l.b16 %v250
    %v825 = vunpack.c.h.b16 %v250
    %v826 = vunpack.c.l.b16 %v251
    %v827 = vunpack.c.h.b16 %v251
    %v828 = vunpack.c.l.b16 %v252
    %v829 = vunpack.c.h.b16 %v252
    %v830 = vunpack.c.l.b16 %v253
    %v831 = vunpack.c.h.b16 %v253
    %v832 = vunpack.c.l.b16 %v254
    %v833 = vunpack.c.h.b16 %v254
    %v834 = vunpack.c.l.b16 %v255
    %v835 = vunpack.c.h.b16 %v255
    %v836 = vunpack.c.l.b16 %v256
    %v837 = vunpack.c.h.b16 %v256
    %v838 = vunpack.c.l.b16 %v257
    %v839 = vunpack.c.h.b16 %v257
    %v840 = vunpack.c.l.b16 %v258
    %v841 = vunpack.c.h.b16 %v258
    %v842 = vunpack.c.l.b16 %v259
    %v843 = vunpack.c.h.b16 %v259
    %v844 = vunpack.c.l.b16 %v260
    %v845 = vunpack.c.h.b16 %v260
    %v846 = vunpack.c.l.b16 %v261
    %v847 = vunpack.c.h.b16 %v261
    %v848 = vunpack.c.l.b16 %v262
    %v849 = vunpack.c.h.b16 %v262
    %v850 = vunpack.c.l.b16 %v263
    %v851 = vunpack.c.h.b16 %v263
    %v852 = vunpack.c.l.b16 %v264
    %v853 = vunpack.c.h.b16 %v264
    %v854 = vunpack.c.l.b16 %v265
    %v855 = vunpack.c.h.b16 %v265
    %v856 = vunpack.c.l.b16 %v266
    %v857 = vunpack.c.h.b16 %v266
    %v858 = vunpack.c.l.b16 %v267
    %v859 = vunpack.c.h.b16 %v267
    %v860 = vunpack.c.l.b16 %v268
    %v861 = vunpack.c.h.b16 %v268
    %v862 = vunpack.c.l.b16 %v269
    %v863 = vunpack.c.h.b16 %v269
    %v864 = vunpack.c.l.b16 %v270
    %v865 = vunpack.c.h.b16 %v270
    %v866 = vunpack.c.l.b16 %v271
    %v867 = vunpack.c.h.b16 %v271
    %v868 = vunpack.c.l.b16 %v272
    %v869 = vunpack.c.h.b16 %v272
    %v870 = vunpack.c.l.b16 %v273
    %v871 = vunpack.c.h.b16 %v273
    %v872 = vunpack.c.l.b16 %v274
    %v873 = vunpack.c.h.b16 %v274
    %v874 = vunpack.c.l.b16 %v275
    %v875 = vunpack.c.h.b16 %v275
    %v876 = vunpack.c.l.b16 %v276
    %v877 = vunpack.c.h.b16 %v276
    %v878 = vunpack.c.l.b16 %v277
    %v879 = vunpack.c.h.b16 %v277
    %v880 = vunpack.c.l.b16 %v278
    %v881 = vunpack.c.h.b16 %v278
    %v882 = vunpack.c.l.b16 %v279
    %v883 = vunpack.c.h.b16 %v279
    %v884 = vunpack.c.l.b16 %v280
    %v885 = vunpack.c.h.b16 %v280
    %v886 = vunpack.c.l.b16 %v281
    %v887 = vunpack.c.h.b16 %v281
    %v888 = vunpack.c.l.b16 %v282
    %v889 = vunpack.c.h.b16 %v282
    %v890 = vunpack.c.l.b16 %v283
    %v891 = vunpack.c.h.b16 %v283
    %v892 = vunpack.c.l.b16 %v284
    %v893 = vunpack.c.h.b16 %v284
    %v894 = vunpack.c.l.b16 %v285
    %v895 = vunpack.c.h.b16 %v285
    %v896 = vunpack.c.l.b16 %v286
    %v897 = vunpack.c.h.b16 %v286
    %v898 = vunpack.c.l.b16 %v287
    %v899 = vunpack.c.h.b16 %v287
    %v900 = vunpack.c.l.b16 %v288
    %v901 = vunpack.c.h.b16 %v288
    %v902 = vunpack.c.l.b16 %v289
    %v903 = vunpack.c.h.b16 %v289
    %v904 = vunpack.c.l.b16 %v290
    %v905 = vunpack.c.h.b16 %v290
    %v906 = vunpack.c.l.b16 %v291
    %v907 = vunpack.c.h.b16 %v291
    %v908 = vunpack.c.l.b16 %v292
    %v909 = vunpack.c.h.b16 %v292
    %v910 = vunpack.c.l.b16 %v293
    %v911 = vunpack.c.h.b16 %v293
    %v912 = vunpack.c.l.b16 %v294
    %v913 = vunpack.c.h.b16 %v294
    %v914 = vpack.c.b16 %v534, %v530
    %v915 = vpack.c.b16 %v535, %v531
    %v916 = vpack.c.b16 %v536, %v532
    %v917 = vpack.c.b16 %v537, %v533
    %v918 = vpack.c.b16 %v542, %v538
    %v919 = vpack.c.b16 %v543, %v539
    %v920 = vpack.c.b16 %v544, %v540
    %v921 = vpack.c.b16 %v545, %v541
    %v922 = vpack.c.b16 %v550, %v546
    %v923 = vpack.c.b16 %v551, %v547
    %v924 = vpack.c.b16 %v552, %v548
    %v925 = vpack.c.b16 %v553, %v549
    %v926 = vpack.c.b16 %v558, %v554
    %v927 = vpack.c.b16 %v559, %v555
    %v928 = vpack.c.b16 %v560, %v556
    %v929 = vpack.c.b16 %v561, %v557
    %v930 = vpack.c.b16 %v566, %v562
    %v931 = vpack.c.b16 %v567, %v563
    %v932 = vpack.c.b16 %v568, %v564
    %v933 = vpack.c.b16 %v569, %v565
    %v934 = vpack.c.b16 %v574, %v570
    %v935 = vpack.c.b16 %v575, %v571
    %v936 = vpack.c.b16 %v576, %v572
    %v937 = vpack.c.b16 %v577, %v573
    %v938 = vpack.c.b16 %v582, %v578
    %v939 = vpack.c.b16 %v583, %v579
    %v940 = vpack.c.b16 %v584, %v580
    %v941 = vpack.c.b16 %v585, %v581
    %v942 = vpack.c.b16 %v590, %v586
    %v943 = vpack.c.b16 %v591, %v587
    %v944 = vpack.c.b16 %v592, %v588
    %v945 = vpack.c.b16 %v593, %v589
    %v946 = vpack.c.b16 %v598, %v594
    %v947 = vpack.c.b16 %v599, %v595
    %v948 = vpack.c.b16 %v600, %v596
    %v949 = vpack.c.b16 %v601, %v597
    %v950 = vpack.c.b16 %v606, %v602
    %v951 = vpack.c.b16 %v607, %v603
    %v952 = vpack.c.b16 %v608, %v604
    %v953 = vpack.c.b16 %v609, %v605
    %v954 = vpack.c.b16 %v614, %v610
    %v955 = vpack.c.b16 %v615, %v611
    %v956 = vpack.c.b16 %v616, %v612
    %v957 = vpack.c.b16 %v617, %v613
    %v958 = vpack.c.b16 %v622, %v618
    %v959 = vpack.c.b16 %v623, %v619
    %v960 = vpack.c.b16 %v624, %v620
    %v961 = vpack.c.b16 %v625, %v621
    %v962 = vpack.c.b16 %v630, %v626
    %v963 = vpack.c.b16 %v631, %v627
    %v964 = vpack.c.b16 %v632, %v628
    %v965 = vpack.c.b16 %v633, %v629
    %v966 = vpack.c.b16 %v638, %v634
    %v967 = vpack.c.b16 %v639, %v635
    %v968 = vpack.c.b16 %v640, %v636
    %v969 = vpack.c.b16 %v641, %v637
    %v970 = vpack.c.b16 %v646, %v642
    %v971 = vpack.c.b16 %v647, %v643
    %v972 = vpack.c.b16 %v648, %v644
    %v973 = vpack.c.b16 %v649, %v645
    %v974 = vpack.c.b16 %v654, %v650
    %v975 = vpack.c.b16 %v655, %v651
    %v976 = vpack.c.b16 %v656, %v652
    %v977 = vpack.c.b16 %v657, %v653
    %v978 = vpack.c.b16 %v662, %v658
    %v979 = vpack.c.b16 %v663, %v659
    %v980 = vpack.c.b16 %v664, %v660
    %v981 = vpack.c.b16 %v665, %v661
    %v982 = vpack.c.b16 %v670, %v666
    %v983 = vpack.c.b16 %v671, %v667
    %v984 = vpack.c.b16 %v672, %v668
    %v985 = vpack.c.b16 %v673, %v669
    %v986 = vpack.c.b16 %v678, %v674
    %v987 = vpack.c.b16 %v679, %v675
    %v988 = vpack.c.b16 %v680, %v676
    %v989 = vpack.c.b16 %v681, %v677
    %v990 = vpack.c.b16 %v686, %v682
    %v991 = vpack.c.b16 %v687, %v683
    %v992 = vpack.c.b16 %v688, %v684
    %v993 = vpack.c.b16 %v689, %v685
    %v994 = vpack.c.b16 %v694, %v690
    %v995 = vpack.c.b16 %v695, %v691
    %v996 = vpack.c.b16 %v696, %v692
    %v997 = vpack.c.b16 %v697, %v693
    %v998 = vpack.c.b16 %v702, %v698
    %v999 = vpack.c.b16 %v703, %v699
    %v1000 = vpack.c.b16 %v704, %v700
    %v1001 = vpack.c.b16 %v705, %v701
    %v1002 = vpack.c.b16 %v710, %v706
    %v1003 = vpack.c.b16 %v711, %v707
    %v1004 = vpack.c.b16 %v712, %v708
    %v1005 = vpack.c.b16 %v713, %v709
    %v1006 = vpack.c.b16 %v718, %v714
    %v1007 = vpack.c.b16 %v719, %v715
    %v1008 = vpack.c.b16 %v720, %v716
    %v1009 = vpack.c.b16 %v721, %v717
    %v1010 = vpack.c.b16 %v726, %v722
    %v1011 = vpack.c.b16 %v727, %v723
    %v1012 = vpack.c.b16 %v728, %v724
    %v1013 = vpack.c.b16 %v729, %v725
    %v1014 = vpack.c.b16 %v734, %v730
    %v1015 = vpack.c.b16 %v735, %v731
    %v1016 = vpack.c.b16 %v736, %v732
    %v1017 = vpack.c.b16 %v737, %v733
    %v1018 = vpack.c.b16 %v742, %v738
    %v1019 = vpack.c.b16 %v743, %v739
    %v1020 = vpack.c.b16 %v744, %v740
    %v1021 = vpack.c.b16 %v745, %v741
    %v1022 = vpack.c.b16 %v750, %v746
    %v1023 = vpack.c.b16 %v751, %v747
    %v1024 = vpack.c.b16 %v752, %v748
    %v1025 = vpack.c.b16 %v753, %v749
    %v1026 = vpack.c.b16 %v758, %v754
    %v1027 = vpack.c.b16 %v759, %v755
    %v1028 = vpack.c.b16 %v760, %v756
    %v1029 = vpack.c.b16 %v761, %v757
    %v1030 = vpack.c.b16 %v766, %v762
    %v1031 = vpack.c.b16 %v767, %v763
    %v1032 = vpack.c.b16 %v768, %v764
    %v1033 = vpack.c.b16 %v769, %v765
    %v1034 = vpack.c.b16 %v774, %v770
    %v1035 = vpack.c.b16 %v775, %v771
    %v1036 = vpack.c.b16 %v776, %v772
    %v1037 = vpack.c.b16 %v777, %v773
    %v1038 = vpack.c.b16 %v782, %v778
    %v1039 = vpack.c.b16 %v783, %v779
    %v1040 = vpack.c.b16 %v784, %v780
    %v1041 = vpack.c.b16 %v785, %v781
    %v1042 = vpack.c.b16 %v790, %v786
    %v1043 = vpack.c.b16 %v791, %v787
    %v1044 = vpack.c.b16 %v792, %v788
    %v1045 = vpack.c.b16 %v793, %v789
    %v1046 = vpack.c.b16 %v798, %v794
    %v1047 = vpack.c.b16 %v799, %v795
    %v1048 = vpack.c.b16 %v800, %v796
    %v1049 = vpack.c.b16 %v801, %v797
    %v1050 = vpack.c.b16 %v806, %v802
    %v1051 = vpack.c.b16 %v807, %v803
    %v1052 = vpack.c.b16 %v808, %v804
    %v1053 = vpack.c.b16 %v809, %v805
    %v1054 = vpack.c.b16 %v814, %v810
    %v1055 = vpack.c.b16 %v815, %v811
    %v1056 = vpack.c.b16 %v816, %v812
    %v1057 = vpack.c.b16 %v817, %v813
    %v1058 = vpack.c.b16 %v822, %v818
    %v1059 = vpack.c.b16 %v823, %v819
    %v1060 = vpack.c.b16 %v824, %v820
    %v1061 = vpack.c.b16 %v825, %v821
    %v1062 = vpack.c.b16 %v830, %v826
    %v1063 = vpack.c.b16 %v831, %v827
    %v1064 = vpack.c.b16 %v832, %v828
    %v1065 = vpack.c.b16 %v833, %v829
    %v1066 = vpack.c.b16 %v838, %v834
    %v1067 = vpack.c.b16 %v839, %v835
    %v1068 = vpack.c.b16 %v840, %v836
    %v1069 = vpack.c.b16 %v841, %v837
    %v1070 = vpack.c.b16 %v846, %v842
    %v1071 = vpack.c.b16 %v847, %v843
    %v1072 = vpack.c.b16 %v848, %v844
    %v1073 = vpack.c.b16 %v849, %v845
    %v1074 = vpack.c.b16 %v854, %v850
    %v1075 = vpack.c.b16 %v855, %v851
    %v1076 = vpack.c.b16 %v856, %v852
    %v1077 = vpack.c.b16 %v857, %v853
    %v1078 = vpack.c.b16 %v862, %v858
    %v1079 = vpack.c.b16 %v863, %v859
    %v1080 = vpack.c.b16 %v864, %v860
    %v1081 = vpack.c.b16 %v865, %v861
    %v1082 = vpack.c.b16 %v870, %v866
    %v1083 = vpack.c.b16 %v871, %v867
    %v1084 = vpack.c.b16 %v872, %v868
    %v1085 = vpack.c.b16 %v873, %v869
    %v1086 = vpack.c.b16 %v878, %v874
    %v1087 = vpack.c.b16 %v879, %v875
    %v1088 = vpack.c.b16 %v880, %v876
    %v1089 = vpack.c.b16 %v881, %v877
    %v1090 = vpack.c.b16 %v886, %v882
    %v1091 = vpack.c.b16 %v887, %v883
    %v1092 = vpack.c.b16 %v888, %v884
    %v1093 = vpack.c.b16 %v889, %v885
    %v1094 = vpack.c.b16 %v894, %v890
    %v1095 = vpack.c.b16 %v895, %v891
    %v1096 = vpack.c.b16 %v896, %v892
    %v1097 = vpack.c.b16 %v897, %v893
    %v1098 = vpack.c.b16 %v902, %v898
    %v1099 = vpack.c.b16 %v903, %v899
    %v1100 = vpack.c.b16 %v904, %v900
    %v1101 = vpack.c.b16 %v905, %v901
    %v1102 = vpack.c.b16 %v910, %v906
    %v1103 = vpack.c.b16 %v911, %v907
    %v1104 = vpack.c.b16 %v912, %v908
    %v1105 = vpack.c.b16 %v913, %v909
    %1298 = vmatprep.subr.bf16.mxu0 %v915
    %1299 = vmatpush1.bf16.msra.mxu0 %v914
    %1300 = vmatprep.subr.bf16.mxu0 %v919
    %1301 = vmatpush1.bf16.msra.mxu0 %v918
    %1302 = vmatprep.subr.bf16.mxu0 %v923
    %1303 = vmatpush1.bf16.msra.mxu0 %v922
    %1304 = vmatprep.subr.bf16.mxu0 %v927
    %1305 = vmatpush1.bf16.msra.mxu0 %v926
    %1306 = vmatprep.subr.bf16.mxu0 %v931
    %1307 = vmatpush1.bf16.msra.mxu0 %v930
    %1308 = vmatprep.subr.bf16.mxu0 %v935
    %1309 = vmatpush1.bf16.msra.mxu0 %v934
    %1310 = vmatprep.subr.bf16.mxu0 %v939
    %1311 = vmatpush1.bf16.msra.mxu0 %v938
    %1312 = vmatprep.subr.bf16.mxu0 %v943
    %1313 = vmatpush1.bf16.msra.mxu0 %v942
    %1314 = vmatprep.subr.bf16.mxu0 %v947
    %1315 = vmatpush1.bf16.msra.mxu0 %v946
    %1316 = vmatprep.subr.bf16.mxu0 %v951
    %1317 = vmatpush1.bf16.msra.mxu0 %v950
    %1318 = vmatprep.subr.bf16.mxu0 %v955
    %1319 = vmatpush1.bf16.msra.mxu0 %v954
    %1320 = vmatprep.subr.bf16.mxu0 %v959
    %1321 = vmatpush1.bf16.msra.mxu0 %v958
    %1322 = vmatprep.subr.bf16.mxu0 %v963
    %1323 = vmatpush1.bf16.msra.mxu0 %v962
    %1324 = vmatprep.subr.bf16.mxu0 %v967
    %1325 = vmatpush1.bf16.msra.mxu0 %v966
    %1326 = vmatprep.subr.bf16.mxu0 %v971
    %1327 = vmatpush1.bf16.msra.mxu0 %v970
    %1328 = vmatprep.subr.bf16.mxu0 %v975
    %1329 = vmatpush1.bf16.msra.mxu0 %v974
    %1330 = vmatprep.mubr.bf16.mxu0 %v327
    %1331 = vmatmul.mubr.bf16.gmra.mrb[0].mxu0 %v326
    %v1332 = vpop.f32.mrb[0].mxu0
    %v1333 = vadd.f32 %v300, %v1332
    %v1334 = vpop.f32.mrb[0].mxu0
    %v1335 = vadd.f32 %v304, %v1334
    %v1336 = vpop.f32.mrb[0].mxu0
    %v1337 = vpop.f32.mrb[0].mxu0
    %1338 = vdwg.mxu0
    %1339 = vmatprep.subr.bf16.mxu0 %v979
    %1340 = vmatpush1.bf16.msra.mxu0 %v978
    %1341 = vmatprep.subr.bf16.mxu0 %v983
    %1342 = vmatpush1.bf16.msra.mxu0 %v982
    %1343 = vmatprep.subr.bf16.mxu0 %v987
    %1344 = vmatpush1.bf16.msra.mxu0 %v986
    %1345 = vmatprep.subr.bf16.mxu0 %v991
    %1346 = vmatpush1.bf16.msra.mxu0 %v990
    %1347 = vmatprep.subr.bf16.mxu0 %v995
    %1348 = vmatpush1.bf16.msra.mxu0 %v994
    %1349 = vmatprep.subr.bf16.mxu0 %v999
    %1350 = vmatpush1.bf16.msra.mxu0 %v998
    %1351 = vmatprep.subr.bf16.mxu0 %v1003
    %1352 = vmatpush1.bf16.msra.mxu0 %v1002
    %1353 = vmatprep.subr.bf16.mxu0 %v1007
    %1354 = vmatpush1.bf16.msra.mxu0 %v1006
    %1355 = vmatprep.subr.bf16.mxu0 %v1011
    %1356 = vmatpush1.bf16.msra.mxu0 %v1010
    %1357 = vmatprep.subr.bf16.mxu0 %v1015
    %1358 = vmatpush1.bf16.msra.mxu0 %v1014
    %1359 = vmatprep.subr.bf16.mxu0 %v1019
    %1360 = vmatpush1.bf16.msra.mxu0 %v1018
    %1361 = vmatprep.subr.bf16.mxu0 %v1023
    %1362 = vmatpush1.bf16.msra.mxu0 %v1022
    %1363 = vmatprep.subr.bf16.mxu0 %v1027
    %1364 = vmatpush1.bf16.msra.mxu0 %v1026
    %1365 = vmatprep.subr.bf16.mxu0 %v1031
    %1366 = vmatpush1.bf16.msra.mxu0 %v1030
    %1367 = vmatprep.subr.bf16.mxu0 %v1035
    %1368 = vmatpush1.bf16.msra.mxu0 %v1034
    %1369 = vmatprep.subr.bf16.mxu0 %v1039
    %1370 = vmatpush1.bf16.msra.mxu0 %v1038
    %1371 = vmatprep.mubr.bf16.mxu0 %v329
    %1372 = vmatmul.mubr.bf16.gmra.mrb[0].mxu0 %v328
    %v1373 = vpop.f32.mrb[0].mxu0
    %v1374 = vadd.f32 %v1333, %v1373
    %v1375 = vpop.f32.mrb[0].mxu0
    %v1376 = vadd.f32 %v1335, %v1375
    %v1377 = vpop.f32.mrb[0].mxu0
    %v1378 = vpop.f32.mrb[0].mxu0
    %1379 = vdwg.mxu0
    %1380 = vmatprep.subr.bf16.mxu0 %v1043
    %1381 = vmatpush1.bf16.msra.mxu0 %v1042
    %1382 = vmatprep.subr.bf16.mxu0 %v1047
    %1383 = vmatpush1.bf16.msra.mxu0 %v1046
    %1384 = vmatprep.subr.bf16.mxu0 %v1051
    %1385 = vmatpush1.bf16.msra.mxu0 %v1050
    %1386 = vmatprep.subr.bf16.mxu0 %v1055
    %1387 = vmatpush1.bf16.msra.mxu0 %v1054
    %1388 = vmatprep.subr.bf16.mxu0 %v1059
    %1389 = vmatpush1.bf16.msra.mxu0 %v1058
    %1390 = vmatprep.subr.bf16.mxu0 %v1063
    %1391 = vmatpush1.bf16.msra.mxu0 %v1062
    %1392 = vmatprep.subr.bf16.mxu0 %v1067
    %1393 = vmatpush1.bf16.msra.mxu0 %v1066
    %1394 = vmatprep.subr.bf16.mxu0 %v1071
    %1395 = vmatpush1.bf16.msra.mxu0 %v1070
    %1396 = vmatprep.subr.bf16.mxu0 %v1075
    %1397 = vmatpush1.bf16.msra.mxu0 %v1074
    %1398 = vmatprep.subr.bf16.mxu0 %v1079
    %1399 = vmatpush1.bf16.msra.mxu0 %v1078
    %1400 = vmatprep.subr.bf16.mxu0 %v1083
    %1401 = vmatpush1.bf16.msra.mxu0 %v1082
    %1402 = vmatprep.subr.bf16.mxu0 %v1087
    %1403 = vmatpush1.bf16.msra.mxu0 %v1086
    %1404 = vmatprep.subr.bf16.mxu0 %v1091
    %1405 = vmatpush1.bf16.msra.mxu0 %v1090
    %1406 = vmatprep.subr.bf16.mxu0 %v1095
    %1407 = vmatpush1.bf16.msra.mxu0 %v1094
    %1408 = vmatprep.subr.bf16.mxu0 %v1099
    %1409 = vmatpush1.bf16.msra.mxu0 %v1098
    %1410 = vmatprep.subr.bf16.mxu0 %v1103
    %1411 = vmatpush1.bf16.msra.mxu0 %v1102
    %1412 = vmatprep.mubr.bf16.mxu0 %v331
    %1413 = vmatmul.mubr.bf16.gmra.mrb[0].mxu0 %v330
    %v1414 = vpop.f32.mrb[0].mxu0
    %v1415 = vadd.f32 %v1374, %v1414
    %v1416 = vpop.f32.mrb[0].mxu0
    %v1417 = vadd.f32 %v1376, %v1416
    %v1418 = vpop.f32.mrb[0].mxu0
    %v1419 = vpop.f32.mrb[0].mxu0
    %1420 = vdwg.mxu0
    %1421 = vmatprep.subr.bf16.mxu0 %v917
    %1422 = vmatpush1.bf16.msra.mxu0 %v916
    %1423 = vmatprep.subr.bf16.mxu0 %v921
    %1424 = vmatpush1.bf16.msra.mxu0 %v920
    %1425 = vmatprep.subr.bf16.mxu0 %v925
    %1426 = vmatpush1.bf16.msra.mxu0 %v924
    %1427 = vmatprep.subr.bf16.mxu0 %v929
    %1428 = vmatpush1.bf16.msra.mxu0 %v928
    %1429 = vmatprep.subr.bf16.mxu0 %v933
    %1430 = vmatpush1.bf16.msra.mxu0 %v932
    %1431 = vmatprep.subr.bf16.mxu0 %v937
    %1432 = vmatpush1.bf16.msra.mxu0 %v936
    %1433 = vmatprep.subr.bf16.mxu0 %v941
    %1434 = vmatpush1.bf16.msra.mxu0 %v940
    %1435 = vmatprep.subr.bf16.mxu0 %v945
    %1436 = vmatpush1.bf16.msra.mxu0 %v944
    %1437 = vmatprep.subr.bf16.mxu0 %v949
    %1438 = vmatpush1.bf16.msra.mxu0 %v948
    %1439 = vmatprep.subr.bf16.mxu0 %v953
    %1440 = vmatpush1.bf16.msra.mxu0 %v952
    %1441 = vmatprep.subr.bf16.mxu0 %v957
    %1442 = vmatpush1.bf16.msra.mxu0 %v956
    %1443 = vmatprep.subr.bf16.mxu0 %v961
    %1444 = vmatpush1.bf16.msra.mxu0 %v960
    %1445 = vmatprep.subr.bf16.mxu0 %v965
    %1446 = vmatpush1.bf16.msra.mxu0 %v964
    %1447 = vmatprep.subr.bf16.mxu0 %v969
    %1448 = vmatpush1.bf16.msra.mxu0 %v968
    %1449 = vmatprep.subr.bf16.mxu0 %v973
    %1450 = vmatpush1.bf16.msra.mxu0 %v972
    %1451 = vmatprep.subr.bf16.mxu0 %v977
    %1452 = vmatpush1.bf16.msra.mxu0 %v976
    %1453 = vmatprep.mubr.bf16.mxu0 %v327
    %1454 = vmatmul.mubr.bf16.gmra.mrb[0].mxu0 %v326
    %v1455 = vpop.f32.mrb[0].mxu0
    %v1456 = vadd.f32 %v308, %v1455
    %v1457 = vpop.f32.mrb[0].mxu0
    %v1458 = vadd.f32 %v312, %v1457
    %v1459 = vpop.f32.mrb[0].mxu0
    %v1460 = vpop.f32.mrb[0].mxu0
    %1461 = vdwg.mxu0
    %1462 = vmatprep.subr.bf16.mxu0 %v981
    %1463 = vmatpush1.bf16.msra.mxu0 %v980
    %1464 = vmatprep.subr.bf16.mxu0 %v985
    %1465 = vmatpush1.bf16.msra.mxu0 %v984
    %1466 = vmatprep.subr.bf16.mxu0 %v989
    %1467 = vmatpush1.bf16.msra.mxu0 %v988
    %1468 = vmatprep.subr.bf16.mxu0 %v993
    %1469 = vmatpush1.bf16.msra.mxu0 %v992
    %1470 = vmatprep.subr.bf16.mxu0 %v997
    %1471 = vmatpush1.bf16.msra.mxu0 %v996
    %1472 = vmatprep.subr.bf16.mxu0 %v1001
    %1473 = vmatpush1.bf16.msra.mxu0 %v1000
    %1474 = vmatprep.subr.bf16.mxu0 %v1005
    %1475 = vmatpush1.bf16.msra.mxu0 %v1004
    %1476 = vmatprep.subr.bf16.mxu0 %v1009
    %1477 = vmatpush1.bf16.msra.mxu0 %v1008
    %1478 = vmatprep.subr.bf16.mxu0 %v1013
    %1479 = vmatpush1.bf16.msra.mxu0 %v1012
    %1480 = vmatprep.subr.bf16.mxu0 %v1017
    %1481 = vmatpush1.bf16.msra.mxu0 %v1016
    %1482 = vmatprep.subr.bf16.mxu0 %v1021
    %1483 = vmatpush1.bf16.msra.mxu0 %v1020
    %1484 = vmatprep.subr.bf16.mxu0 %v1025
    %1485 = vmatpush1.bf16.msra.mxu0 %v1024
    %1486 = vmatprep.subr.bf16.mxu0 %v1029
    %1487 = vmatpush1.bf16.msra.mxu0 %v1028
    %1488 = vmatprep.subr.bf16.mxu0 %v1033
    %1489 = vmatpush1.bf16.msra.mxu0 %v1032
    %1490 = vmatprep.subr.bf16.mxu0 %v1037
    %1491 = vmatpush1.bf16.msra.mxu0 %v1036
    %1492 = vmatprep.subr.bf16.mxu0 %v1041
    %1493 = vmatpush1.bf16.msra.mxu0 %v1040
    %1494 = vmatprep.mubr.bf16.mxu0 %v329
    %1495 = vmatmul.mubr.bf16.gmra.mrb[0].mxu0 %v328
    %v1496 = vpop.f32.mrb[0].mxu0
    %v1497 = vadd.f32 %v1456, %v1496
    %v1498 = vpop.f32.mrb[0].mxu0
    %v1499 = vadd.f32 %v1458, %v1498
    %v1500 = vpop.f32.mrb[0].mxu0
    %v1501 = vpop.f32.mrb[0].mxu0
    %1502 = vdwg.mxu0
    %1503 = vmatprep.subr.bf16.mxu0 %v1045
    %1504 = vmatpush1.bf16.msra.mxu0 %v1044
    %1505 = vmatprep.subr.bf16.mxu0 %v1049
    %1506 = vmatpush1.bf16.msra.mxu0 %v1048
    %1507 = vmatprep.subr.bf16.mxu0 %v1053
    %1508 = vmatpush1.bf16.msra.mxu0 %v1052
    %1509 = vmatprep.subr.bf16.mxu0 %v1057
    %1510 = vmatpush1.bf16.msra.mxu0 %v1056
    %1511 = vmatprep.subr.bf16.mxu0 %v1061
    %1512 = vmatpush1.bf16.msra.mxu0 %v1060
    %1513 = vmatprep.subr.bf16.mxu0 %v1065
    %1514 = vmatpush1.bf16.msra.mxu0 %v1064
    %1515 = vmatprep.subr.bf16.mxu0 %v1069
    %1516 = vmatpush1.bf16.msra.mxu0 %v1068
    %1517 = vmatprep.subr.bf16.mxu0 %v1073
    %1518 = vmatpush1.bf16.msra.mxu0 %v1072
    %1519 = vmatprep.subr.bf16.mxu0 %v1077
    %1520 = vmatpush1.bf16.msra.mxu0 %v1076
    %1521 = vmatprep.subr.bf16.mxu0 %v1081
    %1522 = vmatpush1.bf16.msra.mxu0 %v1080
    %1523 = vmatprep.subr.bf16.mxu0 %v1085
    %1524 = vmatpush1.bf16.msra.mxu0 %v1084
    %1525 = vmatprep.subr.bf16.mxu0 %v1089
    %1526 = vmatpush1.bf16.msra.mxu0 %v1088
    %1527 = vmatprep.subr.bf16.mxu0 %v1093
    %1528 = vmatpush1.bf16.msra.mxu0 %v1092
    %1529 = vmatprep.subr.bf16.mxu0 %v1097
    %1530 = vmatpush1.bf16.msra.mxu0 %v1096
    %1531 = vmatprep.subr.bf16.mxu0 %v1101
    %1532 = vmatpush1.bf16.msra.mxu0 %v1100
    %1533 = vmatprep.subr.bf16.mxu0 %v1105
    %1534 = vmatpush1.bf16.msra.mxu0 %v1104
    %1535 = vmatprep.mubr.bf16.mxu0 %v331
    %1536 = vmatmul.mubr.bf16.gmra.mrb[0].mxu0 %v330
    %v1537 = vpop.f32.mrb[0].mxu0
    %v1538 = vadd.f32 %v1497, %v1537
    %v1539 = vpop.f32.mrb[0].mxu0
    %v1540 = vadd.f32 %v1499, %v1539
    %v1541 = vpop.f32.mrb[0].mxu0
    %v1542 = vpop.f32.mrb[0].mxu0
    %1543 = vdwg.mxu0
    %v1544 = vmax.f32 %v1415, 0.0
    %v1545 = vmax.f32 %v1417, 0.0
    %v1546 = vmax.f32 %v1538, 0.0
    %v1547 = vmax.f32 %v1540, 0.0
    %v1548 = vpack.c.bf16 %v1544, %v1544
    %v1549 = vpack.c.bf16 %v1545, %v1545
    %v1550 = vpack.c.bf16 %v1546, %v1546
    %v1551 = vpack.c.bf16 %v1547, %v1547
    %v1552 = vld [vmem:[#allocation7] sm:$0xff]
    %v1553 = vld [vmem:[#allocation7 + $0x8] sm:$0xff]
    %v1554 = vld [vmem:[#allocation7 + $0x10] sm:$0xff]
    %v1555 = vld [vmem:[#allocation7 + $0x18] sm:$0xff]
    %v1556 = vld [vmem:[#allocation7 + $0x20] sm:$0xff]
    %v1557 = vld [vmem:[#allocation7 + $0x28] sm:$0xff]
    %v1558 = vld [vmem:[#allocation7 + $0x30] sm:$0xff]
    %v1559 = vld [vmem:[#allocation7 + $0x38] sm:$0xff]
    %v1560 = vld [vmem:[#allocation7 + $0x40] sm:$0xff]
    %v1561 = vld [vmem:[#allocation7 + $0x48] sm:$0xff]
    %v1562 = vld [vmem:[#allocation7 + $0x50] sm:$0xff]
    %v1563 = vld [vmem:[#allocation7 + $0x58] sm:$0xff]
    %v1564 = vld [vmem:[#allocation7 + $0x60] sm:$0xff]
    %v1565 = vld [vmem:[#allocation7 + $0x68] sm:$0xff]
    %v1566 = vld [vmem:[#allocation7 + $0x70] sm:$0xff]
    %v1567 = vld [vmem:[#allocation7 + $0x78] sm:$0xff]
    %v1568 = vld [vmem:[#allocation7 + $0x80] sm:$0xff]
    %v1569 = vld [vmem:[#allocation7 + $0x88] sm:$0xff]
    %v1570 = vld [vmem:[#allocation7 + $0x90] sm:$0xff]
    %v1571 = vld [vmem:[#allocation7 + $0x98] sm:$0xff]
    %v1572 = vld [vmem:[#allocation7 + $0xa0] sm:$0xff]
    %v1573 = vld [vmem:[#allocation7 + $0xa8] sm:$0xff]
    %v1574 = vld [vmem:[#allocation7 + $0xb0] sm:$0xff]
    %v1575 = vld [vmem:[#allocation7 + $0xb8] sm:$0xff]
    %v1576 = vld [vmem:[#allocation7 + $0xc0] sm:$0xff]
    %v1577 = vld [vmem:[#allocation7 + $0xc8] sm:$0xff]
    %v1578 = vld [vmem:[#allocation7 + $0xd0] sm:$0xff]
    %v1579 = vld [vmem:[#allocation7 + $0xd8] sm:$0xff]
    %v1580 = vld [vmem:[#allocation7 + $0xe0] sm:$0xff]
    %v1581 = vld [vmem:[#allocation7 + $0xe8] sm:$0xff]
    %v1582 = vld [vmem:[#allocation7 + $0xf0] sm:$0xff]
    %v1583 = vld [vmem:[#allocation7 + $0xf8] sm:$0xff]
    %v1584 = vld [vmem:[#allocation7 + $0x100] sm:$0xff]
    %v1585 = vld [vmem:[#allocation7 + $0x108] sm:$0xff]
    %v1586 = vld [vmem:[#allocation7 + $0x110] sm:$0xff]
    %v1587 = vld [vmem:[#allocation7 + $0x118] sm:$0xff]
    %v1588 = vld [vmem:[#allocation7 + $0x120] sm:$0xff]
    %v1589 = vld [vmem:[#allocation7 + $0x128] sm:$0xff]
    %v1590 = vld [vmem:[#allocation7 + $0x130] sm:$0xff]
    %v1591 = vld [vmem:[#allocation7 + $0x138] sm:$0xff]
    %v1592 = vld [vmem:[#allocation7 + $0x140] sm:$0xff]
    %v1593 = vld [vmem:[#allocation7 + $0x148] sm:$0xff]
    %v1594 = vld [vmem:[#allocation7 + $0x150] sm:$0xff]
    %v1595 = vld [vmem:[#allocation7 + $0x158] sm:$0xff]
    %v1596 = vld [vmem:[#allocation7 + $0x160] sm:$0xff]
    %v1597 = vld [vmem:[#allocation7 + $0x168] sm:$0xff]
    %v1598 = vld [vmem:[#allocation7 + $0x170] sm:$0xff]
    %v1599 = vld [vmem:[#allocation7 + $0x178] sm:$0xff]
    %v1600 = vld [vmem:[#allocation7 + $0x180] sm:$0xff]
    %v1601 = vld [vmem:[#allocation7 + $0x188] sm:$0xff]
    %v1602 = vld [vmem:[#allocation7 + $0x190] sm:$0xff]
    %v1603 = vld [vmem:[#allocation7 + $0x198] sm:$0xff]
    %v1604 = vld [vmem:[#allocation7 + $0x1a0] sm:$0xff]
    %v1605 = vld [vmem:[#allocation7 + $0x1a8] sm:$0xff]
    %v1606 = vld [vmem:[#allocation7 + $0x1b0] sm:$0xff]
    %v1607 = vld [vmem:[#allocation7 + $0x1b8] sm:$0xff]
    %v1608 = vld [vmem:[#allocation7 + $0x1c0] sm:$0xff]
    %v1609 = vld [vmem:[#allocation7 + $0x1c8] sm:$0xff]
    %v1610 = vld [vmem:[#allocation7 + $0x1d0] sm:$0xff]
    %v1611 = vld [vmem:[#allocation7 + $0x1d8] sm:$0xff]
    %v1612 = vld [vmem:[#allocation7 + $0x1e0] sm:$0xff]
    %v1613 = vld [vmem:[#allocation7 + $0x1e8] sm:$0xff]
    %v1614 = vld [vmem:[#allocation7 + $0x1f0] sm:$0xff]
    %v1615 = vld [vmem:[#allocation7 + $0x1f8] sm:$0xff]
    %v1616 = vld [vmem:[%s4] sm:$0x3]
    %v1618 = vlaneseq
    %v1619 = vshrl.u32 %v1618, 7
    %v1620 = vsub.s32 0, %v1619
    %v1621 = vrot.slane %v1616, %v1620
    %v1622 = vlaneseq
    %v1623 = vshrl.u32 %v1622, 7
    %v1624 = vsub.s32 1, %v1623
    %v1625 = vrot.slane %v1616, %v1624
    %v1692 = vunpack.c.l.b16 %v1552
    %v1693 = vunpack.c.h.b16 %v1552
    %v1694 = vunpack.c.l.b16 %v1553
    %v1695 = vunpack.c.h.b16 %v1553
    %v1696 = vunpack.c.l.b16 %v1554
    %v1697 = vunpack.c.h.b16 %v1554
    %v1698 = vunpack.c.l.b16 %v1555
    %v1699 = vunpack.c.h.b16 %v1555
    %v1700 = vunpack.c.l.b16 %v1556
    %v1701 = vunpack.c.h.b16 %v1556
    %v1702 = vunpack.c.l.b16 %v1557
    %v1703 = vunpack.c.h.b16 %v1557
    %v1704 = vunpack.c.l.b16 %v1558
    %v1705 = vunpack.c.h.b16 %v1558
    %v1706 = vunpack.c.l.b16 %v1559
    %v1707 = vunpack.c.h.b16 %v1559
    %v1708 = vunpack.c.l.b16 %v1560
    %v1709 = vunpack.c.h.b16 %v1560
    %v1710 = vunpack.c.l.b16 %v1561
    %v1711 = vunpack.c.h.b16 %v1561
    %v1712 = vunpack.c.l.b16 %v1562
    %v1713 = vunpack.c.h.b16 %v1562
    %v1714 = vunpack.c.l.b16 %v1563
    %v1715 = vunpack.c.h.b16 %v1563
    %v1716 = vunpack.c.l.b16 %v1564
    %v1717 = vunpack.c.h.b16 %v1564
    %v1718 = vunpack.c.l.b16 %v1565
    %v1719 = vunpack.c.h.b16 %v1565
    %v1720 = vunpack.c.l.b16 %v1566
    %v1721 = vunpack.c.h.b16 %v1566
    %v1722 = vunpack.c.l.b16 %v1567
    %v1723 = vunpack.c.h.b16 %v1567
    %v1724 = vunpack.c.l.b16 %v1568
    %v1725 = vunpack.c.h.b16 %v1568
    %v1726 = vunpack.c.l.b16 %v1569
    %v1727 = vunpack.c.h.b16 %v1569
    %v1728 = vunpack.c.l.b16 %v1570
    %v1729 = vunpack.c.h.b16 %v1570
    %v1730 = vunpack.c.l.b16 %v1571
    %v1731 = vunpack.c.h.b16 %v1571
    %v1732 = vunpack.c.l.b16 %v1572
    %v1733 = vunpack.c.h.b16 %v1572
    %v1734 = vunpack.c.l.b16 %v1573
    %v1735 = vunpack.c.h.b16 %v1573
    %v1736 = vunpack.c.l.b16 %v1574
    %v1737 = vunpack.c.h.b16 %v1574
    %v1738 = vunpack.c.l.b16 %v1575
    %v1739 = vunpack.c.h.b16 %v1575
    %v1740 = vunpack.c.l.b16 %v1576
    %v1741 = vunpack.c.h.b16 %v1576
    %v1742 = vunpack.c.l.b16 %v1577
    %v1743 = vunpack.c.h.b16 %v1577
    %v1744 = vunpack.c.l.b16 %v1578
    %v1745 = vunpack.c.h.b16 %v1578
    %v1746 = vunpack.c.l.b16 %v1579
    %v1747 = vunpack.c.h.b16 %v1579
    %v1748 = vunpack.c.l.b16 %v1580
    %v1749 = vunpack.c.h.b16 %v1580
    %v1750 = vunpack.c.l.b16 %v1581
    %v1751 = vunpack.c.h.b16 %v1581
    %v1752 = vunpack.c.l.b16 %v1582
    %v1753 = vunpack.c.h.b16 %v1582
    %v1754 = vunpack.c.l.b16 %v1583
    %v1755 = vunpack.c.h.b16 %v1583
    %v1756 = vunpack.c.l.b16 %v1584
    %v1757 = vunpack.c.h.b16 %v1584
    %v1758 = vunpack.c.l.b16 %v1585
    %v1759 = vunpack.c.h.b16 %v1585
    %v1760 = vunpack.c.l.b16 %v1586
    %v1761 = vunpack.c.h.b16 %v1586
    %v1762 = vunpack.c.l.b16 %v1587
    %v1763 = vunpack.c.h.b16 %v1587
    %v1764 = vunpack.c.l.b16 %v1588
    %v1765 = vunpack.c.h.b16 %v1588
    %v1766 = vunpack.c.l.b16 %v1589
    %v1767 = vunpack.c.h.b16 %v1589
    %v1768 = vunpack.c.l.b16 %v1590
    %v1769 = vunpack.c.h.b16 %v1590
    %v1770 = vunpack.c.l.b16 %v1591
    %v1771 = vunpack.c.h.b16 %v1591
    %v1772 = vunpack.c.l.b16 %v1592
    %v1773 = vunpack.c.h.b16 %v1592
    %v1774 = vunpack.c.l.b16 %v1593
    %v1775 = vunpack.c.h.b16 %v1593
    %v1776 = vunpack.c.l.b16 %v1594
    %v1777 = vunpack.c.h.b16 %v1594
    %v1778 = vunpack.c.l.b16 %v1595
    %v1779 = vunpack.c.h.b16 %v1595
    %v1780 = vunpack.c.l.b16 %v1596
    %v1781 = vunpack.c.h.b16 %v1596
    %v1782 = vunpack.c.l.b16 %v1597
    %v1783 = vunpack.c.h.b16 %v1597
    %v1784 = vunpack.c.l.b16 %v1598
    %v1785 = vunpack.c.h.b16 %v1598
    %v1786 = vunpack.c.l.b16 %v1599
    %v1787 = vunpack.c.h.b16 %v1599
    %v1788 = vunpack.c.l.b16 %v1600
    %v1789 = vunpack.c.h.b16 %v1600
    %v1790 = vunpack.c.l.b16 %v1601
    %v1791 = vunpack.c.h.b16 %v1601
    %v1792 = vunpack.c.l.b16 %v1602
    %v1793 = vunpack.c.h.b16 %v1602
    %v1794 = vunpack.c.l.b16 %v1603
    %v1795 = vunpack.c.h.b16 %v1603
    %v1796 = vunpack.c.l.b16 %v1604
    %v1797 = vunpack.c.h.b16 %v1604
    %v1798 = vunpack.c.l.b16 %v1605
    %v1799 = vunpack.c.h.b16 %v1605
    %v1800 = vunpack.c.l.b16 %v1606
    %v1801 = vunpack.c.h.b16 %v1606
    %v1802 = vunpack.c.l.b16 %v1607
    %v1803 = vunpack.c.h.b16 %v1607
    %v1804 = vunpack.c.l.b16 %v1608
    %v1805 = vunpack.c.h.b16 %v1608
    %v1806 = vunpack.c.l.b16 %v1609
    %v1807 = vunpack.c.h.b16 %v1609
    %v1808 = vunpack.c.l.b16 %v1610
    %v1809 = vunpack.c.h.b16 %v1610
    %v1810 = vunpack.c.l.b16 %v1611
    %v1811 = vunpack.c.h.b16 %v1611
    %v1812 = vunpack.c.l.b16 %v1612
    %v1813 = vunpack.c.h.b16 %v1612
    %v1814 = vunpack.c.l.b16 %v1613
    %v1815 = vunpack.c.h.b16 %v1613
    %v1816 = vunpack.c.l.b16 %v1614
    %v1817 = vunpack.c.h.b16 %v1614
    %v1818 = vunpack.c.l.b16 %v1615
    %v1819 = vunpack.c.h.b16 %v1615
    %v1820 = vpack.c.b16 %v1694, %v1692
    %v1821 = vpack.c.b16 %v1695, %v1693
    %v1822 = vpack.c.b16 %v1698, %v1696
    %v1823 = vpack.c.b16 %v1699, %v1697
    %v1824 = vpack.c.b16 %v1702, %v1700
    %v1825 = vpack.c.b16 %v1703, %v1701
    %v1826 = vpack.c.b16 %v1706, %v1704
    %v1827 = vpack.c.b16 %v1707, %v1705
    %v1828 = vpack.c.b16 %v1710, %v1708
    %v1829 = vpack.c.b16 %v1711, %v1709
    %v1830 = vpack.c.b16 %v1714, %v1712
    %v1831 = vpack.c.b16 %v1715, %v1713
    %v1832 = vpack.c.b16 %v1718, %v1716
    %v1833 = vpack.c.b16 %v1719, %v1717
    %v1834 = vpack.c.b16 %v1722, %v1720
    %v1835 = vpack.c.b16 %v1723, %v1721
    %v1836 = vpack.c.b16 %v1726, %v1724
    %v1837 = vpack.c.b16 %v1727, %v1725
    %v1838 = vpack.c.b16 %v1730, %v1728
    %v1839 = vpack.c.b16 %v1731, %v1729
    %v1840 = vpack.c.b16 %v1734, %v1732
    %v1841 = vpack.c.b16 %v1735, %v1733
    %v1842 = vpack.c.b16 %v1738, %v1736
    %v1843 = vpack.c.b16 %v1739, %v1737
    %v1844 = vpack.c.b16 %v1742, %v1740
    %v1845 = vpack.c.b16 %v1743, %v1741
    %v1846 = vpack.c.b16 %v1746, %v1744
    %v1847 = vpack.c.b16 %v1747, %v1745
    %v1848 = vpack.c.b16 %v1750, %v1748
    %v1849 = vpack.c.b16 %v1751, %v1749
    %v1850 = vpack.c.b16 %v1754, %v1752
    %v1851 = vpack.c.b16 %v1755, %v1753
    %v1852 = vpack.c.b16 %v1758, %v1756
    %v1853 = vpack.c.b16 %v1759, %v1757
    %v1854 = vpack.c.b16 %v1762, %v1760
    %v1855 = vpack.c.b16 %v1763, %v1761
    %v1856 = vpack.c.b16 %v1766, %v1764
    %v1857 = vpack.c.b16 %v1767, %v1765
    %v1858 = vpack.c.b16 %v1770, %v1768
    %v1859 = vpack.c.b16 %v1771, %v1769
    %v1860 = vpack.c.b16 %v1774, %v1772
    %v1861 = vpack.c.b16 %v1775, %v1773
    %v1862 = vpack.c.b16 %v1778, %v1776
    %v1863 = vpack.c.b16 %v1779, %v1777
    %v1864 = vpack.c.b16 %v1782, %v1780
    %v1865 = vpack.c.b16 %v1783, %v1781
    %v1866 = vpack.c.b16 %v1786, %v1784
    %v1867 = vpack.c.b16 %v1787, %v1785
    %v1868 = vpack.c.b16 %v1790, %v1788
    %v1869 = vpack.c.b16 %v1791, %v1789
    %v1870 = vpack.c.b16 %v1794, %v1792
    %v1871 = vpack.c.b16 %v1795, %v1793
    %v1872 = vpack.c.b16 %v1798, %v1796
    %v1873 = vpack.c.b16 %v1799, %v1797
    %v1874 = vpack.c.b16 %v1802, %v1800
    %v1875 = vpack.c.b16 %v1803, %v1801
    %v1876 = vpack.c.b16 %v1806, %v1804
    %v1877 = vpack.c.b16 %v1807, %v1805
    %v1878 = vpack.c.b16 %v1810, %v1808
    %v1879 = vpack.c.b16 %v1811, %v1809
    %v1880 = vpack.c.b16 %v1814, %v1812
    %v1881 = vpack.c.b16 %v1815, %v1813
    %v1882 = vpack.c.b16 %v1818, %v1816
    %v1883 = vpack.c.b16 %v1819, %v1817
    %1948 = vmatprep.subr.bf16.mxu0 %v1821
    %1949 = vmatpush1.bf16.msra.mxu0 %v1820
    %1950 = vmatprep.subr.bf16.mxu0 %v1823
    %1951 = vmatpush1.bf16.msra.mxu0 %v1822
    %1952 = vmatprep.subr.bf16.mxu0 %v1825
    %1953 = vmatpush1.bf16.msra.mxu0 %v1824
    %1954 = vmatprep.subr.bf16.mxu0 %v1827
    %1955 = vmatpush1.bf16.msra.mxu0 %v1826
    %1956 = vmatprep.subr.bf16.mxu0 %v1829
    %1957 = vmatpush1.bf16.msra.mxu0 %v1828
    %1958 = vmatprep.subr.bf16.mxu0 %v1831
    %1959 = vmatpush1.bf16.msra.mxu0 %v1830
    %1960 = vmatprep.subr.bf16.mxu0 %v1833
    %1961 = vmatpush1.bf16.msra.mxu0 %v1832
    %1962 = vmatprep.subr.bf16.mxu0 %v1835
    %1963 = vmatpush1.bf16.msra.mxu0 %v1834
    %1964 = vmatprep.subr.bf16.mxu0 %v1837
    %1965 = vmatpush1.bf16.msra.mxu0 %v1836
    %1966 = vmatprep.subr.bf16.mxu0 %v1839
    %1967 = vmatpush1.bf16.msra.mxu0 %v1838
    %1968 = vmatprep.subr.bf16.mxu0 %v1841
    %1969 = vmatpush1.bf16.msra.mxu0 %v1840
    %1970 = vmatprep.subr.bf16.mxu0 %v1843
    %1971 = vmatpush1.bf16.msra.mxu0 %v1842
    %1972 = vmatprep.subr.bf16.mxu0 %v1845
    %1973 = vmatpush1.bf16.msra.mxu0 %v1844
    %1974 = vmatprep.subr.bf16.mxu0 %v1847
    %1975 = vmatpush1.bf16.msra.mxu0 %v1846
    %1976 = vmatprep.subr.bf16.mxu0 %v1849
    %1977 = vmatpush1.bf16.msra.mxu0 %v1848
    %1978 = vmatprep.subr.bf16.mxu0 %v1851
    %1979 = vmatpush1.bf16.msra.mxu0 %v1850
    %1980 = vmatprep.mubr.bf16.mxu0 %v1549
    %1981 = vmatmul.mubr.bf16.gmra.mrb[0].mxu0 %v1548
    %v1982 = vpop.f32.mrb[0].mxu0
    %v1983 = vadd.f32 %v1621, %v1982
    %v1984 = vpop.f32.mrb[0].mxu0
    %v1985 = vadd.f32 %v1625, %v1984
    %v1986 = vpop.f32.mrb[0].mxu0
    %v1987 = vpop.f32.mrb[0].mxu0
    %1988 = vdwg.mxu0
    %1989 = vmatprep.subr.bf16.mxu0 %v1853
    %1990 = vmatpush1.bf16.msra.mxu0 %v1852
    %1991 = vmatprep.subr.bf16.mxu0 %v1855
    %1992 = vmatpush1.bf16.msra.mxu0 %v1854
    %1993 = vmatprep.subr.bf16.mxu0 %v1857
    %1994 = vmatpush1.bf16.msra.mxu0 %v1856
    %1995 = vmatprep.subr.bf16.mxu0 %v1859
    %1996 = vmatpush1.bf16.msra.mxu0 %v1858
    %1997 = vmatprep.subr.bf16.mxu0 %v1861
    %1998 = vmatpush1.bf16.msra.mxu0 %v1860
    %1999 = vmatprep.subr.bf16.mxu0 %v1863
    %2000 = vmatpush1.bf16.msra.mxu0 %v1862
    %2001 = vmatprep.subr.bf16.mxu0 %v1865
    %2002 = vmatpush1.bf16.msra.mxu0 %v1864
    %2003 = vmatprep.subr.bf16.mxu0 %v1867
    %2004 = vmatpush1.bf16.msra.mxu0 %v1866
    %2005 = vmatprep.subr.bf16.mxu0 %v1869
    %2006 = vmatpush1.bf16.msra.mxu0 %v1868
    %2007 = vmatprep.subr.bf16.mxu0 %v1871
    %2008 = vmatpush1.bf16.msra.mxu0 %v1870
    %2009 = vmatprep.subr.bf16.mxu0 %v1873
    %2010 = vmatpush1.bf16.msra.mxu0 %v1872
    %2011 = vmatprep.subr.bf16.mxu0 %v1875
    %2012 = vmatpush1.bf16.msra.mxu0 %v1874
    %2013 = vmatprep.subr.bf16.mxu0 %v1877
    %2014 = vmatpush1.bf16.msra.mxu0 %v1876
    %2015 = vmatprep.subr.bf16.mxu0 %v1879
    %2016 = vmatpush1.bf16.msra.mxu0 %v1878
    %2017 = vmatprep.subr.bf16.mxu0 %v1881
    %2018 = vmatpush1.bf16.msra.mxu0 %v1880
    %2019 = vmatprep.subr.bf16.mxu0 %v1883
    %2020 = vmatpush1.bf16.msra.mxu0 %v1882
    %2021 = vmatprep.mubr.bf16.mxu0 %v1551
    %2022 = vmatmul.mubr.bf16.gmra.mrb[0].mxu0 %v1550
    %v2023 = vpop.f32.mrb[0].mxu0
    %v2024 = vadd.f32 %v1983, %v2023
    %v2025 = vpop.f32.mrb[0].mxu0
    %v2026 = vadd.f32 %v1985, %v2025
    %v2027 = vpop.f32.mrb[0].mxu0
    %v2028 = vpop.f32.mrb[0].mxu0
    %2029 = vdwg.mxu0
    %v2030 = vmax.f32 %v2024, 0.0
    %v2031 = vmax.f32 %v2026, 0.0
    %v2032 = vpack.c.bf16 %v2030, %v2030
    %v2033 = vpack.c.bf16 %v2031, %v2031
    %v2034 = vld [vmem:[#allocation8] sm:$0xf]
    %v2035 = vld [vmem:[#allocation8 + $0x4] sm:$0xf]
    %v2036 = vld [vmem:[#allocation8 + $0x8] sm:$0xf]
    %v2037 = vld [vmem:[#allocation8 + $0xc] sm:$0xf]
    %v2038 = vld [vmem:[#allocation8 + $0x10] sm:$0xf]
    %v2039 = vld [vmem:[#allocation8 + $0x14] sm:$0xf]
    %v2040 = vld [vmem:[#allocation8 + $0x18] sm:$0xf]
    %v2041 = vld [vmem:[#allocation8 + $0x1c] sm:$0xf]
    %v2042 = vld [vmem:[#allocation8 + $0x20] sm:$0xf]
    %v2043 = vld [vmem:[#allocation8 + $0x24] sm:$0xf]
    %v2044 = vld [vmem:[#allocation8 + $0x28] sm:$0xf]
    %v2045 = vld [vmem:[#allocation8 + $0x2c] sm:$0xf]
    %v2046 = vld [vmem:[#allocation8 + $0x30] sm:$0xf]
    %v2047 = vld [vmem:[#allocation8 + $0x34] sm:$0xf]
    %v2048 = vld [vmem:[#allocation8 + $0x38] sm:$0xf]
    %v2049 = vld [vmem:[#allocation8 + $0x3c] sm:$0xf]
    %v2050 = vld [vmem:[#allocation8 + $0x40] sm:$0xf]
    %v2051 = vld [vmem:[#allocation8 + $0x44] sm:$0xf]
    %v2052 = vld [vmem:[#allocation8 + $0x48] sm:$0xf]
    %v2053 = vld [vmem:[#allocation8 + $0x4c] sm:$0xf]
    %v2054 = vld [vmem:[#allocation8 + $0x50] sm:$0xf]
    %v2055 = vld [vmem:[#allocation8 + $0x54] sm:$0xf]
    %v2056 = vld [vmem:[#allocation8 + $0x58] sm:$0xf]
    %v2057 = vld [vmem:[#allocation8 + $0x5c] sm:$0xf]
    %v2058 = vld [vmem:[#allocation8 + $0x60] sm:$0xf]
    %v2059 = vld [vmem:[#allocation8 + $0x64] sm:$0xf]
    %v2060 = vld [vmem:[#allocation8 + $0x68] sm:$0xf]
    %v2061 = vld [vmem:[#allocation8 + $0x6c] sm:$0xf]
    %v2062 = vld [vmem:[#allocation8 + $0x70] sm:$0xf]
    %v2063 = vld [vmem:[#allocation8 + $0x74] sm:$0xf]
    %v2064 = vld [vmem:[#allocation8 + $0x78] sm:$0xf]
    %v2065 = vld [vmem:[#allocation8 + $0x7c] sm:$0xf]
    %v2066 = vld [vmem:[%s6] sm:$0x1]
    %v2068 = vlaneseq
    %v2069 = vshrl.u32 %v2068, 7
    %v2070 = vsub.s32 0, %v2069
    %v2071 = vrot.slane %v2066, %v2070
    %v2105 = vunpack.c.l.b16 %v2034
    %v2106 = vunpack.c.l.b16 %v2035
    %v2107 = vunpack.c.l.b16 %v2036
    %v2108 = vunpack.c.l.b16 %v2037
    %v2109 = vunpack.c.l.b16 %v2038
    %v2110 = vunpack.c.l.b16 %v2039
    %v2111 = vunpack.c.l.b16 %v2040
    %v2112 = vunpack.c.l.b16 %v2041
    %v2113 = vunpack.c.l.b16 %v2042
    %v2114 = vunpack.c.l.b16 %v2043
    %v2115 = vunpack.c.l.b16 %v2044
    %v2116 = vunpack.c.l.b16 %v2045
    %v2117 = vunpack.c.l.b16 %v2046
    %v2118 = vunpack.c.l.b16 %v2047
    %v2119 = vunpack.c.l.b16 %v2048
    %v2120 = vunpack.c.l.b16 %v2049
    %v2121 = vunpack.c.l.b16 %v2050
    %v2122 = vunpack.c.l.b16 %v2051
    %v2123 = vunpack.c.l.b16 %v2052
    %v2124 = vunpack.c.l.b16 %v2053
    %v2125 = vunpack.c.l.b16 %v2054
    %v2126 = vunpack.c.l.b16 %v2055
    %v2127 = vunpack.c.l.b16 %v2056
    %v2128 = vunpack.c.l.b16 %v2057
    %v2129 = vunpack.c.l.b16 %v2058
    %v2130 = vunpack.c.l.b16 %v2059
    %v2131 = vunpack.c.l.b16 %v2060
    %v2132 = vunpack.c.l.b16 %v2061
    %v2133 = vunpack.c.l.b16 %v2062
    %v2134 = vunpack.c.l.b16 %v2063
    %v2135 = vunpack.c.l.b16 %v2064
    %v2136 = vunpack.c.l.b16 %v2065
    %v2137 = vpack.c.b16 %v2106, %v2105
    %v2138 = vpack.c.b16 %v2108, %v2107
    %v2139 = vpack.c.b16 %v2110, %v2109
    %v2140 = vpack.c.b16 %v2112, %v2111
    %v2141 = vpack.c.b16 %v2114, %v2113
    %v2142 = vpack.c.b16 %v2116, %v2115
    %v2143 = vpack.c.b16 %v2118, %v2117
    %v2144 = vpack.c.b16 %v2120, %v2119
    %v2145 = vpack.c.b16 %v2122, %v2121
    %v2146 = vpack.c.b16 %v2124, %v2123
    %v2147 = vpack.c.b16 %v2126, %v2125
    %v2148 = vpack.c.b16 %v2128, %v2127
    %v2149 = vpack.c.b16 %v2130, %v2129
    %v2150 = vpack.c.b16 %v2132, %v2131
    %v2151 = vpack.c.b16 %v2134, %v2133
    %v2152 = vpack.c.b16 %v2136, %v2135
    %2169 = vmatprep.subr.bf16.mxu0 0
    %2170 = vmatpush1.bf16.msra.mxu0 %v2137
    %2171 = vmatprep.subr.bf16.mxu0 0
    %2172 = vmatpush1.bf16.msra.mxu0 %v2138
    %2173 = vmatprep.subr.bf16.mxu0 0
    %2174 = vmatpush1.bf16.msra.mxu0 %v2139
    %2175 = vmatprep.subr.bf16.mxu0 0
    %2176 = vmatpush1.bf16.msra.mxu0 %v2140
    %2177 = vmatprep.subr.bf16.mxu0 0
    %2178 = vmatpush1.bf16.msra.mxu0 %v2141
    %2179 = vmatprep.subr.bf16.mxu0 0
    %2180 = vmatpush1.bf16.msra.mxu0 %v2142
    %2181 = vmatprep.subr.bf16.mxu0 0
    %2182 = vmatpush1.bf16.msra.mxu0 %v2143
    %2183 = vmatprep.subr.bf16.mxu0 0
    %2184 = vmatpush1.bf16.msra.mxu0 %v2144
    %2185 = vmatprep.subr.bf16.mxu0 0
    %2186 = vmatpush1.bf16.msra.mxu0 %v2145
    %2187 = vmatprep.subr.bf16.mxu0 0
    %2188 = vmatpush1.bf16.msra.mxu0 %v2146
    %2189 = vmatprep.subr.bf16.mxu0 0
    %2190 = vmatpush1.bf16.msra.mxu0 %v2147
    %2191 = vmatprep.subr.bf16.mxu0 0
    %2192 = vmatpush1.bf16.msra.mxu0 %v2148
    %2193 = vmatprep.subr.bf16.mxu0 0
    %2194 = vmatpush1.bf16.msra.mxu0 %v2149
    %2195 = vmatprep.subr.bf16.mxu0 0
    %2196 = vmatpush1.bf16.msra.mxu0 %v2150
    %2197 = vmatprep.subr.bf16.mxu0 0
    %2198 = vmatpush1.bf16.msra.mxu0 %v2151
    %2199 = vmatprep.subr.bf16.mxu0 0
    %2200 = vmatpush1.bf16.msra.mxu0 %v2152
    %2201 = vmatprep.mubr.bf16.mxu0 %v2033
    %2202 = vmatmul.mubr.bf16.gmra.mrb[0].mxu0 %v2032
    %v2203 = vpop.f32.mrb[0].mxu0
    %v2204 = vadd.f32 %v2071, %v2203
    %v2205 = vpop.f32.mrb[0].mxu0
    %v2206 = vpop.f32.mrb[0].mxu0
    %v2207 = vpop.f32.mrb[0].mxu0
    %2208 = vdwg.mxu0
    %v2209 = vmax.f32 %v2204, 0.0
    %v2210 = vpack.c.bf16 %v2209, %v2209
    %v2211 = vld [vmem:[#allocation10] sm:$0xf]
    %v2212 = vld [vmem:[#allocation10 + $0x4] sm:$0xf]
    %v2213 = vld [vmem:[#allocation10 + $0x8] sm:$0xf]
    %v2214 = vld [vmem:[#allocation10 + $0xc] sm:$0xf]
    %v2215 = vld [vmem:[#allocation10 + $0x10] sm:$0xf]
    %v2216 = vld [vmem:[#allocation10 + $0x14] sm:$0xf]
    %v2217 = vld [vmem:[#allocation10 + $0x18] sm:$0xf]
    %v2218 = vld [vmem:[#allocation10 + $0x1c] sm:$0xf]
    %v2219 = vld [vmem:[#allocation10 + $0x20] sm:$0xf]
    %v2220 = vld [vmem:[#allocation10 + $0x24] sm:$0xf]
    %v2221 = vld [vmem:[#allocation10 + $0x28] sm:$0xf]
    %v2222 = vld [vmem:[#allocation10 + $0x2c] sm:$0xf]
    %v2223 = vld [vmem:[#allocation10 + $0x30] sm:$0xf]
    %v2224 = vld [vmem:[#allocation10 + $0x34] sm:$0xf]
    %v2225 = vld [vmem:[#allocation10 + $0x38] sm:$0xf]
    %v2226 = vld [vmem:[#allocation10 + $0x3c] sm:$0xf]
    %v2227 = vld [vmem:[%s8] sm:$0x1]
    %v2229 = vlaneseq
    %v2230 = vshrl.u32 %v2229, 7
    %v2231 = vsub.s32 0, %v2230
    %v2232 = vrot.slane %v2227, %v2231
    %v2250 = vunpack.c.l.b16 %v2211
    %v2251 = vunpack.c.l.b16 %v2212
    %v2252 = vunpack.c.l.b16 %v2213
    %v2253 = vunpack.c.l.b16 %v2214
    %v2254 = vunpack.c.l.b16 %v2215
    %v2255 = vunpack.c.l.b16 %v2216
    %v2256 = vunpack.c.l.b16 %v2217
    %v2257 = vunpack.c.l.b16 %v2218
    %v2258 = vunpack.c.l.b16 %v2219
    %v2259 = vunpack.c.l.b16 %v2220
    %v2260 = vunpack.c.l.b16 %v2221
    %v2261 = vunpack.c.l.b16 %v2222
    %v2262 = vunpack.c.l.b16 %v2223
    %v2263 = vunpack.c.l.b16 %v2224
    %v2264 = vunpack.c.l.b16 %v2225
    %v2265 = vunpack.c.l.b16 %v2226
    %v2266 = vpack.c.b16 %v2251, %v2250
    %v2267 = vpack.c.b16 %v2253, %v2252
    %v2268 = vpack.c.b16 %v2255, %v2254
    %v2269 = vpack.c.b16 %v2257, %v2256
    %v2270 = vpack.c.b16 %v2259, %v2258
    %v2271 = vpack.c.b16 %v2261, %v2260
    %v2272 = vpack.c.b16 %v2263, %v2262
    %v2273 = vpack.c.b16 %v2265, %v2264
    %2282 = vmatprep.subr.bf16.mxu0 0
    %2283 = vmatpush1.bf16.msra.mxu0 %v2266
    %2284 = vmatprep.subr.bf16.mxu0 0
    %2285 = vmatpush1.bf16.msra.mxu0 %v2267
    %2286 = vmatprep.subr.bf16.mxu0 0
    %2287 = vmatpush1.bf16.msra.mxu0 %v2268
    %2288 = vmatprep.subr.bf16.mxu0 0
    %2289 = vmatpush1.bf16.msra.mxu0 %v2269
    %2290 = vmatprep.subr.bf16.mxu0 0
    %2291 = vmatpush1.bf16.msra.mxu0 %v2270
    %2292 = vmatprep.subr.bf16.mxu0 0
    %2293 = vmatpush1.bf16.msra.mxu0 %v2271
    %2294 = vmatprep.subr.bf16.mxu0 0
    %2295 = vmatpush1.bf16.msra.mxu0 %v2272
    %2296 = vmatprep.subr.bf16.mxu0 0
    %2297 = vmatpush1.bf16.msra.mxu0 %v2273
    %2298 = vmatprep.subr.bf16.mxu0 0
    %2299 = vmatpush1.bf16.msra.mxu0 0
    %2300 = vmatprep.subr.bf16.mxu0 0
    %2301 = vmatpush1.bf16.msra.mxu0 0
    %2302 = vmatprep.subr.bf16.mxu0 0
    %2303 = vmatpush1.bf16.msra.mxu0 0
    %2304 = vmatprep.subr.bf16.mxu0 0
    %2305 = vmatpush1.bf16.msra.mxu0 0
    %2306 = vmatprep.subr.bf16.mxu0 0
    %2307 = vmatpush1.bf16.msra.mxu0 0
    %2308 = vmatprep.subr.bf16.mxu0 0
    %2309 = vmatpush1.bf16.msra.mxu0 0
    %2310 = vmatprep.subr.bf16.mxu0 0
    %2311 = vmatpush1.bf16.msra.mxu0 0
    %2312 = vmatprep.subr.bf16.mxu0 0
    %2313 = vmatpush1.bf16.msra.mxu0 0
    %2314 = vmatprep.mubr.bf16.mxu0 0
    %2315 = vmatmul.mubr.bf16.gmra.mrb[0].mxu0 %v2210
    %v2316 = vpop.f32.mrb[0].mxu0
    %v2317 = vadd.f32 %v2232, %v2316
    %v2318 = vpop.f32.mrb[0].mxu0
    %v2319 = vpop.f32.mrb[0].mxu0
    %v2320 = vpop.f32.mrb[0].mxu0
    %2321 = vdwg.mxu0
    %v2322 = vlaneseq
    %v2323 = vand.u32 %v2322, 127
    %vm2324 = vcmp.lt.s32.totalorder %v2323, 10
    %v2325 = vsel %vm2324, %v2317, -1e+30
    %2326 = vmax.xlane.f32.xlu0 %v2325
    %v2327 = vpop.xlane.xlu0 %2326
    %v2328 = vsub.f32 %v2325, %v2327
    %v2329 = vmul.f32 %v2328, 1.442695
    %v2330 = vpow.pop %v2329
    %2331 = vadd.xlane.f32.xlu0 %v2330
    %v2332 = vpop.xlane.xlu0 %2331
    %v2333 = vlog2.pop %v2332
    %v2334 = vmul.f32 %v2333, 0.6931472
    %v2335 = vsub.f32 %v2328, %v2334
    %2336 = vst [vmem:[#allocation11] sm:$0xff] %v2335
    // Predicated region
    $region58: #{tpu_custom_call.1} parent=1 // pred_check
      _
    $region59: #{tpu_custom_call.1} parent=1 // pred_check_branch
      %2338 = sbr.rel (0) target = $region61
    $region60: #{tpu_custom_call.1} parent=1 // pred_region
      %s2340 = ssub.s32 128, 128
      %2341 = vsyncadd [#allocation4], %s2340
      %s2343 = sshll.u32 [#allocation11], 4
      %s2344 = int_to_ptr.vmem [resolvable:$true] %s2343
      %2346 = dma.vmem_to_hbm [thread:$0]  %s2344, 128, %s9, [#allocation4]
    $region61: #{tpu_custom_call.1} parent=1 // pred_fallthru
      _
    // Predicated region
    $region62: #{tpu_custom_call.1} parent=1 // pred_check
      _
    $region63: #{tpu_custom_call.1} parent=1 // pred_check_branch
      %2348 = sbr.rel (0) target = $region65
    $region64: #{tpu_custom_call.1} parent=1 // pred_region
      %2349 = dma.done [#allocation4], 128
    $region65: #{tpu_custom_call.1} parent=1 // pred_fallthru
      _
    %2350 = vsyncpa [#allocation3], 1
    %2351 = vsyncpa [#allocation6], 1
    %2352 = vsyncpa [#allocation9], 1
    %2353 = vsyncpa [#allocation4], 1

</llo_original>
